<compile_context>
chip_gen: v7x
topology: tpu7x:2x2x1
jax: 0.10.0
libtpu: 0.0.40
codegen_flags: <defaults>
</compile_context>

<pallas_src>
import functools

import jax
import jax.numpy as jnp
from jax.experimental import pallas as pl
from jax.experimental.pallas import tpu as pltpu

EPS_IDENTITY = 1e-6  # matches `1e-06 * torch.eye(3)` regularizer


def _round_up(x, m):
  return ((x + m - 1) // m) * m


def _plane_normal_loss_kernel(pp_ref, pc_ref, pn_ref, gp_ref, gc_ref, gn_ref,
                              out_ref, *, fx, fy, patch_size, height, width,
                              row_tile, halo):
  """One (batch, row-tile) grid step: depth tile -> normals -> sum |dn|."""
  P = patch_size
  r = P // 2
  TH = row_tile
  W = width              # real (un-padded) image width
  HALO = halo            # sublane-aligned vertical halo (>= r)

  t = pl.program_id(1)
  n_tiles = pl.num_programs(1)
  # zero the halo at the true image top / bottom -> conv2d zero padding
  top_keep = (t > 0).astype(jnp.float32)
  bot_keep = (t < n_tiles - 1).astype(jnp.float32)

  # coordinate grids generated in-kernel (no HBM inputs for u/v)
  rows = jax.lax.broadcasted_iota(jnp.int32, (TH + 2 * HALO, W + 2 * r), 0)
  cols = jax.lax.broadcasted_iota(jnp.int32, (TH + 2 * HALO, W + 2 * r), 1)
  row_off = (t * TH - HALO).astype(jnp.float32)
  v_coord = rows.astype(jnp.float32) + row_off - height / 2.0   # v - H/2
  u_coord = cols.astype(jnp.float32) - (r + width / 2.0)        # u - W/2

  def box_sum(m):
    """PxP box sum with zero padding; (TH+2*HALO, W+2r) -> (TH, W).

    Separable shifted-add: (P-1) sublane-offset adds + (P-1) lane-offset adds
    per map (VPU/XLU) instead of two banded MXU matmuls.
    """
    acc = m[HALO - r:HALO - r + TH, :]
    for o in range(1, P):
      acc = acc + m[HALO - r + o:HALO - r + o + TH, :]
    out = acc[:, 0:W]
    for o in range(1, P):
      out = out + acc[:, o:o + W]
    return out

  def oriented_normals(prev_ref, cen_ref, nxt_ref):
    cen = cen_ref[0]                                    # (TH, W+2r)
    top = prev_ref[0][TH - HALO:, :] * top_keep         # (HALO, W+2r)
    bot = nxt_ref[0][:HALO, :] * bot_keep               # (HALO, W+2r)
    d = jnp.concatenate([top, cen, bot], axis=0)        # (TH+2*HALO, W+2r)

    x = u_coord * d * (1.0 / fx)
    y = v_coord * d * (1.0 / fy)
    z = d

    # patch moments (A^T A and A^T 1 of the plane-fit system)
    sxx, syy, szz = box_sum(x * x), box_sum(y * y), box_sum(z * z)
    sxy, sxz, syz = box_sum(x * y), box_sum(x * z), box_sum(y * z)
    sx, sy, sz = box_sum(x), box_sum(y), box_sum(z)

    a11 = sxx + EPS_IDENTITY
    a22 = syy + EPS_IDENTITY
    a33 = szz + EPS_IDENTITY
    a12, a13, a23 = sxy, sxz, syz

    # cofactors of the symmetric 3x3 matrix (adjugate == cofactor matrix)
    c11 = a22 * a33 - a23 * a23
    c12 = a13 * a23 - a12 * a33
    c13 = a12 * a23 - a13 * a22
    c22 = a11 * a33 - a13 * a13
    c23 = a12 * a13 - a11 * a23
    c33 = a11 * a22 - a12 * a12
    det = a11 * c11 + a12 * c12 + a13 * c13
    inv_det = 1.0 / det          # exact divide: det ~ eps^3 for flat patches

    n1 = (c11 * sx + c12 * sy + c13 * sz) * inv_det
    n2 = (c12 * sx + c22 * sy + c23 * sz) * inv_det
    n3 = (c13 * sx + c23 * sy + c33 * sz) * inv_det

    inv_norm = jax.lax.rsqrt(n1 * n1 + n2 * n2 + n3 * n3)   # single EUP op
    n1, n2, n3 = n1 * inv_norm, n2 * inv_norm, n3 * inv_norm

    # orient: flip where the normal points along the viewing ray
    xc = x[HALO:HALO + TH, r:r + W]
    yc = y[HALO:HALO + TH, r:r + W]
    dc = cen[:, r:r + W]                       # = z at the centre pixels
    flip = (n1 * xc + n2 * yc + n3 * dc) > 0.0
    sgn = jnp.where(flip, jnp.float32(-1.0), jnp.float32(1.0))
    n1, n2, n3 = n1 * sgn, n2 * sgn, n3 * sgn

    # invalid-depth mask (valid_mask = depth > 0 in the reference forward);
    # also guards the NaN from rsqrt(0) on all-zero patches.
    valid = dc > 0.0
    zero = jnp.zeros_like(n1)
    return (jnp.where(valid, n1, zero),
            jnp.where(valid, n2, zero),
            jnp.where(valid, n3, zero))

  # gt first, then prediction -> fewer full-tile maps live at peak
  g1, g2, g3 = oriented_normals(gp_ref, gc_ref, gn_ref)
  p1, p2, p3 = oriented_normals(pp_ref, pc_ref, pn_ref)

  err = jnp.abs(p1 - g1) + jnp.abs(p2 - g2) + jnp.abs(p3 - g3)
  # reduce inside the kernel; tiny (8,128) partial-sum block per grid step
  out_ref[0, 0] = jnp.broadcast_to(jnp.sum(err), (8, 128))


def patch_plane_approx_loss(prediction, gt, *, fx, fy, patch_size,
                            row_tile=None):
  assert prediction.shape == gt.shape
  b, c, h, w = prediction.shape
  assert c == 1, "depth maps are expected to be single-channel (NCHW, C=1)"
  assert patch_size % 2 == 1, "patch_size must be odd (same-size convolution)"
  r = patch_size // 2
  halo = _round_up(max(r, 1), 8)            # sublane-aligned vertical halo

  if row_tile is None:
    row_tile = min(128, _round_up(h, 8))    # ~128 rows/tile bounds VMEM
  row_tile = max(_round_up(int(row_tile), 8), halo)

  h_pad = _round_up(h, row_tile)
  n_tiles = h_pad // row_tile
  wp = w + 2 * r

  def prep(depth):
    d = depth.reshape(b, h, w).astype(jnp.float32)
    # zero rows at the bottom (to a multiple of row_tile) + r zero columns on
    # each side: zeros reproduce the conv2d zero padding and contribute
    # nothing to the loss (depth<=0 pixels get zero normals for pred AND gt).
    return jnp.pad(d, ((0, 0), (0, h_pad - h), (r, r)))

  pred_p = prep(prediction)
  gt_p = prep(gt)

  kernel = functools.partial(
      _plane_normal_loss_kernel, fx=float(fx), fy=float(fy),
      patch_size=int(patch_size), height=float(h), width=int(w),
      row_tile=int(row_tile), halo=int(halo))

  # three views of each depth map: previous / current / next row tile
  # (clamped at the image boundary; the kernel masks the halo there).
  prev_map = lambda i, j: (i, jnp.maximum(j - 1, 0), 0)
  cen_map = lambda i, j: (i, j, 0)
  next_map = lambda i, j: (i, jnp.minimum(j + 1, n_tiles - 1), 0)
  spec_prev = pl.BlockSpec((1, row_tile, wp), prev_map)
  spec_cen = pl.BlockSpec((1, row_tile, wp), cen_map)
  spec_next = pl.BlockSpec((1, row_tile, wp), next_map)

  partial_sums = pl.pallas_call(
      kernel,
      out_shape=jax.ShapeDtypeStruct((b, n_tiles, 8, 128), jnp.float32),
      grid_spec=pltpu.PrefetchScalarGridSpec(
          num_scalar_prefetch=0,
          grid=(b, n_tiles),
          in_specs=[spec_prev, spec_cen, spec_next,      # prediction depth
                    spec_prev, spec_cen, spec_next],     # gt depth
          out_specs=pl.BlockSpec((1, 1, 8, 128), lambda i, j: (i, j, 0, 0)),
      ),
      compiler_params=pltpu.CompilerParams(
          dimension_semantics=("parallel", "parallel"),
          vmem_limit_bytes=48 * 1024 * 1024),
  )(pred_p, pred_p, pred_p, gt_p, gt_p, gt_p)

  # mean over the (B, 3, H, W) elements of |n_pred - n_gt|
  total = jnp.sum(partial_sums[:, :, 0, 0])
  return total / jnp.float32(b * 3 * h * w)


def _reference_loss(prediction, gt, *, fx, fy, patch_size):
  """Pure-JAX reference (reduce_window box filter + batched 3x3 LU solve)."""
  r = patch_size // 2
  b, c, h, w = prediction.shape
  u = jnp.broadcast_to(
      jnp.arange(w, dtype=jnp.float32)[None, :] - w / 2.0, (h, w))
  v = jnp.broadcast_to(
      jnp.arange(h, dtype=jnp.float32)[:, None] - h / 2.0, (h, w))

  def normals(depth):
    d = depth.reshape(b, h, w).astype(jnp.float32)
    x = u[None] * d / fx
    y = v[None] * d / fy
    z = d
    feats = jnp.stack([x * x, y * y, z * z, x * y, x * z, y * z, x, y, z],
                      axis=1)
    summed = jax.lax.reduce_window(
        feats, jnp.float32(0.0), jax.lax.add,
        window_dimensions=(1, 1, patch_size, patch_size),
        window_strides=(1, 1, 1, 1),
        padding=((0, 0), (0, 0), (r, r), (r, r)))
    sxx, syy, szz, sxy, sxz, syz, sx, sy, sz = [summed[:, i] for i in range(9)]
    e = EPS_IDENTITY
    ata = jnp.stack([
        jnp.stack([sxx + e, sxy, sxz], axis=-1),
        jnp.stack([sxy, syy + e, syz], axis=-1),
        jnp.stack([sxz, syz, szz + e], axis=-1)], axis=-2)    # (b,h,w,3,3)
    at1 = jnp.stack([sx, sy, sz], axis=-1)[..., None]          # (b,h,w,3,1)
    n = jnp.linalg.solve(ata, at1)[..., 0]                     # (b,h,w,3)
    n = n / jnp.sqrt(jnp.sum(n * n, axis=-1, keepdims=True))
    xyz = jnp.stack([x, y, z], axis=-1)
    flip = jnp.sum(n * xyz, axis=-1, keepdims=True) > 0
    n = jnp.where(flip, -n, n)
    valid = (d > 0)[..., None]
    return jnp.where(valid, n, 0.0)

  return jnp.mean(jnp.abs(normals(prediction) - normals(gt)))


if __name__ == "__main__":
  key = jax.random.PRNGKey(0)
  k1, k2 = jax.random.split(key)

  # config-equivalent constants for the test
  B, C, H, W = 2, 1, 16, 16      # SOLVER.BATCHSIZE, depth channel, crop size
  FX = FY = 8.0                  # DATA.FX_Depth / FY_Depth
  PATCH = 5                      # LOSS.PATCH_SIZE (odd -> same-size conv)

  prediction = jax.random.uniform(k1, (B, C, H, W), jnp.float32, 1.0, 5.0)
  gt = jax.random.uniform(k2, (B, C, H, W), jnp.float32, 1.0, 5.0)
  # a few invalid (depth <= 0) pixels so the valid-mask path is exercised
  gt = gt.at[0, 0, 5:7, 5:7].set(0.0)
  prediction = prediction.at[1, 0, 9:11, 2:4].set(0.0)

  # row_tile=8 -> 2 row tiles per image: exercises the halo / boundary path.
  loss = patch_plane_approx_loss(prediction, gt, fx=FX, fy=FY,
                                 patch_size=PATCH, row_tile=8)
  jax.block_until_ready(loss)

  ref = _reference_loss(prediction, gt, fx=FX, fy=FY, patch_size=PATCH)
  assert bool(jnp.isfinite(loss)), loss
  assert jnp.allclose(loss, ref, rtol=5e-3, atol=5e-4), (loss, ref)

  print("KERNEL_OK")
</pallas_src>

<mosaic_0001>
module attributes {stable_mosaic.version = 11 : i64} {
  func.func @_plane_normal_loss_kernel(%arg0: i32, %arg1: i32, %arg2: memref<1x8x20xf32, #tpu.memory_space<vmem>>, %arg3: memref<1x8x20xf32, #tpu.memory_space<vmem>>, %arg4: memref<1x8x20xf32, #tpu.memory_space<vmem>>, %arg5: memref<1x8x20xf32, #tpu.memory_space<vmem>>, %arg6: memref<1x8x20xf32, #tpu.memory_space<vmem>>, %arg7: memref<1x8x20xf32, #tpu.memory_space<vmem>>, %arg8: memref<1x1x8x128xf32, #tpu.memory_space<vmem>>) attributes {dimension_semantics = [#tpu.dimension_semantics<parallel>, #tpu.dimension_semantics<parallel>], iteration_bounds = array<i64: 2, 2>, scalar_prefetch = 0 : i64, scratch_operands = 0 : i64, tpu.core_type = #tpu.core_type<tc>, window_params = [{transform_indices = @transform_0, window_bounds = array<i64: 1, 8, 20>}, {transform_indices = @transform_1, window_bounds = array<i64: 1, 8, 20>}, {transform_indices = @transform_2, window_bounds = array<i64: 1, 8, 20>}, {transform_indices = @transform_3, window_bounds = array<i64: 1, 8, 20>}, {transform_indices = @transform_4, window_bounds = array<i64: 1, 8, 20>}, {transform_indices = @transform_5, window_bounds = array<i64: 1, 8, 20>}, {transform_indices = @transform_6, window_bounds = array<i64: 1, 1, 8, 128>}]} {
    %c0_i32 = arith.constant 0 : i32
    %0 = arith.cmpi sgt, %arg1, %c0_i32 : i32
    %1 = arith.extui %0 : i1 to i32
    %2 = arith.sitofp %1 : i32 to f32
    %c1_i32 = arith.constant 1 : i32
    %3 = arith.cmpi slt, %arg1, %c1_i32 : i32
    %4 = arith.extui %3 : i1 to i32
    %5 = arith.sitofp %4 : i32 to f32
    %6 = tpu.iota {dimensions = array<i32: 0>} : vector<24x20xi32>
    %7 = tpu.iota {dimensions = array<i32: 1>} : vector<24x20xi32>
    %c8_i32 = arith.constant 8 : i32
    %8 = arith.muli %arg1, %c8_i32 : i32
    %c8_i32_0 = arith.constant 8 : i32
    %9 = arith.subi %8, %c8_i32_0 : i32
    %10 = arith.sitofp %9 : i32 to f32
    %11 = arith.sitofp %6 : vector<24x20xi32> to vector<24x20xf32>
    %12 = vector.broadcast %10 : f32 to vector<24x20xf32>
    %13 = arith.addf %11, %12 : vector<24x20xf32>
    %cst = arith.constant 8.000000e+00 : f32
    %14 = vector.broadcast %cst : f32 to vector<24x20xf32>
    %15 = arith.subf %13, %14 : vector<24x20xf32>
    %16 = arith.sitofp %7 : vector<24x20xi32> to vector<24x20xf32>
    %cst_1 = arith.constant 1.000000e+01 : f32
    %17 = vector.broadcast %cst_1 : f32 to vector<24x20xf32>
    %18 = arith.subf %16, %17 : vector<24x20xf32>
    %c0 = arith.constant 0 : index
    %c0_2 = arith.constant 0 : index
    %c0_3 = arith.constant 0 : index
    %19 = vector.load %arg6[%c0, %c0_2, %c0_3] : memref<1x8x20xf32, #tpu.memory_space<vmem>>, vector<1x8x20xf32>
    %20 = vector.shape_cast %19 : vector<1x8x20xf32> to vector<8x20xf32>
    %c0_4 = arith.constant 0 : index
    %c0_5 = arith.constant 0 : index
    %c0_6 = arith.constant 0 : index
    %21 = vector.load %arg5[%c0_4, %c0_5, %c0_6] : memref<1x8x20xf32, #tpu.memory_space<vmem>>, vector<1x8x20xf32>
    %22 = vector.shape_cast %21 : vector<1x8x20xf32> to vector<8x20xf32>
    %23 = vector.broadcast %2 : f32 to vector<8x20xf32>
    %24 = arith.mulf %22, %23 : vector<8x20xf32>
    %c0_7 = arith.constant 0 : index
    %c0_8 = arith.constant 0 : index
    %c0_9 = arith.constant 0 : index
    %25 = vector.load %arg7[%c0_7, %c0_8, %c0_9] : memref<1x8x20xf32, #tpu.memory_space<vmem>>, vector<1x8x20xf32>
    %26 = vector.shape_cast %25 : vector<1x8x20xf32> to vector<8x20xf32>
    %27 = vector.broadcast %5 : f32 to vector<8x20xf32>
    %28 = arith.mulf %26, %27 : vector<8x20xf32>
    %29 = tpu.concatenate %24, %20, %28 in 0 : vector<8x20xf32>, vector<8x20xf32>, vector<8x20xf32> -> vector<24x20xf32>
    %30 = arith.mulf %18, %29 : vector<24x20xf32>
    %cst_10 = arith.constant 1.250000e-01 : f32
    %31 = vector.broadcast %cst_10 : f32 to vector<24x20xf32>
    %32 = arith.mulf %30, %31 : vector<24x20xf32>
    %33 = arith.mulf %15, %29 : vector<24x20xf32>
    %cst_11 = arith.constant 1.250000e-01 : f32
    %34 = vector.broadcast %cst_11 : f32 to vector<24x20xf32>
    %35 = arith.mulf %33, %34 : vector<24x20xf32>
    %36 = arith.mulf %32, %32 : vector<24x20xf32>
    %37 = vector.extract_strided_slice %36 {offsets = [6, 0], sizes = [8, 20], strides = [1, 1]} : vector<24x20xf32> to vector<8x20xf32>
    %38 = vector.extract_strided_slice %36 {offsets = [7, 0], sizes = [8, 20], strides = [1, 1]} : vector<24x20xf32> to vector<8x20xf32>
    %39 = arith.addf %37, %38 : vector<8x20xf32>
    %40 = vector.extract_strided_slice %36 {offsets = [8, 0], sizes = [8, 20], strides = [1, 1]} : vector<24x20xf32> to vector<8x20xf32>
    %41 = arith.addf %39, %40 : vector<8x20xf32>
    %42 = vector.extract_strided_slice %36 {offsets = [9, 0], sizes = [8, 20], strides = [1, 1]} : vector<24x20xf32> to vector<8x20xf32>
    %43 = arith.addf %41, %42 : vector<8x20xf32>
    %44 = vector.extract_strided_slice %36 {offsets = [10, 0], sizes = [8, 20], strides = [1, 1]} : vector<24x20xf32> to vector<8x20xf32>
    %45 = arith.addf %43, %44 : vector<8x20xf32>
    %46 = vector.extract_strided_slice %45 {offsets = [0, 0], sizes = [8, 16], strides = [1, 1]} : vector<8x20xf32> to vector<8x16xf32>
    %47 = vector.extract_strided_slice %45 {offsets = [0, 1], sizes = [8, 16], strides = [1, 1]} : vector<8x20xf32> to vector<8x16xf32>
    %48 = arith.addf %46, %47 : vector<8x16xf32>
    %49 = vector.extract_strided_slice %45 {offsets = [0, 2], sizes = [8, 16], strides = [1, 1]} : vector<8x20xf32> to vector<8x16xf32>
    %50 = arith.addf %48, %49 : vector<8x16xf32>
    %51 = vector.extract_strided_slice %45 {offsets = [0, 3], sizes = [8, 16], strides = [1, 1]} : vector<8x20xf32> to vector<8x16xf32>
    %52 = arith.addf %50, %51 : vector<8x16xf32>
    %53 = vector.extract_strided_slice %45 {offsets = [0, 4], sizes = [8, 16], strides = [1, 1]} : vector<8x20xf32> to vector<8x16xf32>
    %54 = arith.addf %52, %53 : vector<8x16xf32>
    %55 = arith.mulf %35, %35 : vector<24x20xf32>
    %56 = vector.extract_strided_slice %55 {offsets = [6, 0], sizes = [8, 20], strides = [1, 1]} : vector<24x20xf32> to vector<8x20xf32>
    %57 = vector.extract_strided_slice %55 {offsets = [7, 0], sizes = [8, 20], strides = [1, 1]} : vector<24x20xf32> to vector<8x20xf32>
    %58 = arith.addf %56, %57 : vector<8x20xf32>
    %59 = vector.extract_strided_slice %55 {offsets = [8, 0], sizes = [8, 20], strides = [1, 1]} : vector<24x20xf32> to vector<8x20xf32>
    %60 = arith.addf %58, %59 : vector<8x20xf32>
    %61 = vector.extract_strided_slice %55 {offsets = [9, 0], sizes = [8, 20], strides = [1, 1]} : vector<24x20xf32> to vector<8x20xf32>
    %62 = arith.addf %60, %61 : vector<8x20xf32>
    %63 = vector.extract_strided_slice %55 {offsets = [10, 0], sizes = [8, 20], strides = [1, 1]} : vector<24x20xf32> to vector<8x20xf32>
    %64 = arith.addf %62, %63 : vector<8x20xf32>
    %65 = vector.extract_strided_slice %64 {offsets = [0, 0], sizes = [8, 16], strides = [1, 1]} : vector<8x20xf32> to vector<8x16xf32>
    %66 = vector.extract_strided_slice %64 {offsets = [0, 1], sizes = [8, 16], strides = [1, 1]} : vector<8x20xf32> to vector<8x16xf32>
    %67 = arith.addf %65, %66 : vector<8x16xf32>
    %68 = vector.extract_strided_slice %64 {offsets = [0, 2], sizes = [8, 16], strides = [1, 1]} : vector<8x20xf32> to vector<8x16xf32>
    %69 = arith.addf %67, %68 : vector<8x16xf32>
    %70 = vector.extract_strided_slice %64 {offsets = [0, 3], sizes = [8, 16], strides = [1, 1]} : vector<8x20xf32> to vector<8x16xf32>
    %71 = arith.addf %69, %70 : vector<8x16xf32>
    %72 = vector.extract_strided_slice %64 {offsets = [0, 4], sizes = [8, 16], strides = [1, 1]} : vector<8x20xf32> to vector<8x16xf32>
    %73 = arith.addf %71, %72 : vector<8x16xf32>
    %74 = arith.mulf %29, %29 : vector<24x20xf32>
    %75 = vector.extract_strided_slice %74 {offsets = [6, 0], sizes = [8, 20], strides = [1, 1]} : vector<24x20xf32> to vector<8x20xf32>
    %76 = vector.extract_strided_slice %74 {offsets = [7, 0], sizes = [8, 20], strides = [1, 1]} : vector<24x20xf32> to vector<8x20xf32>
    %77 = arith.addf %75, %76 : vector<8x20xf32>
    %78 = vector.extract_strided_slice %74 {offsets = [8, 0], sizes = [8, 20], strides = [1, 1]} : vector<24x20xf32> to vector<8x20xf32>
    %79 = arith.addf %77, %78 : vector<8x20xf32>
    %80 = vector.extract_strided_slice %74 {offsets = [9, 0], sizes = [8, 20], strides = [1, 1]} : vector<24x20xf32> to vector<8x20xf32>
    %81 = arith.addf %79, %80 : vector<8x20xf32>
    %82 = vector.extract_strided_slice %74 {offsets = [10, 0], sizes = [8, 20], strides = [1, 1]} : vector<24x20xf32> to vector<8x20xf32>
    %83 = arith.addf %81, %82 : vector<8x20xf32>
    %84 = vector.extract_strided_slice %83 {offsets = [0, 0], sizes = [8, 16], strides = [1, 1]} : vector<8x20xf32> to vector<8x16xf32>
    %85 = vector.extract_strided_slice %83 {offsets = [0, 1], sizes = [8, 16], strides = [1, 1]} : vector<8x20xf32> to vector<8x16xf32>
    %86 = arith.addf %84, %85 : vector<8x16xf32>
    %87 = vector.extract_strided_slice %83 {offsets = [0, 2], sizes = [8, 16], strides = [1, 1]} : vector<8x20xf32> to vector<8x16xf32>
    %88 = arith.addf %86, %87 : vector<8x16xf32>
    %89 = vector.extract_strided_slice %83 {offsets = [0, 3], sizes = [8, 16], strides = [1, 1]} : vector<8x20xf32> to vector<8x16xf32>
    %90 = arith.addf %88, %89 : vector<8x16xf32>
    %91 = vector.extract_strided_slice %83 {offsets = [0, 4], sizes = [8, 16], strides = [1, 1]} : vector<8x20xf32> to vector<8x16xf32>
    %92 = arith.addf %90, %91 : vector<8x16xf32>
    %93 = arith.mulf %32, %35 : vector<24x20xf32>
    %94 = vector.extract_strided_slice %93 {offsets = [6, 0], sizes = [8, 20], strides = [1, 1]} : vector<24x20xf32> to vector<8x20xf32>
    %95 = vector.extract_strided_slice %93 {offsets = [7, 0], sizes = [8, 20], strides = [1, 1]} : vector<24x20xf32> to vector<8x20xf32>
    %96 = arith.addf %94, %95 : vector<8x20xf32>
    %97 = vector.extract_strided_slice %93 {offsets = [8, 0], sizes = [8, 20], strides = [1, 1]} : vector<24x20xf32> to vector<8x20xf32>
    %98 = arith.addf %96, %97 : vector<8x20xf32>
    %99 = vector.extract_strided_slice %93 {offsets = [9, 0], sizes = [8, 20], strides = [1, 1]} : vector<24x20xf32> to vector<8x20xf32>
    %100 = arith.addf %98, %99 : vector<8x20xf32>
    %101 = vector.extract_strided_slice %93 {offsets = [10, 0], sizes = [8, 20], strides = [1, 1]} : vector<24x20xf32> to vector<8x20xf32>
    %102 = arith.addf %100, %101 : vector<8x20xf32>
    %103 = vector.extract_strided_slice %102 {offsets = [0, 0], sizes = [8, 16], strides = [1, 1]} : vector<8x20xf32> to vector<8x16xf32>
    %104 = vector.extract_strided_slice %102 {offsets = [0, 1], sizes = [8, 16], strides = [1, 1]} : vector<8x20xf32> to vector<8x16xf32>
    %105 = arith.addf %103, %104 : vector<8x16xf32>
    %106 = vector.extract_strided_slice %102 {offsets = [0, 2], sizes = [8, 16], strides = [1, 1]} : vector<8x20xf32> to vector<8x16xf32>
    %107 = arith.addf %105, %106 : vector<8x16xf32>
    %108 = vector.extract_strided_slice %102 {offsets = [0, 3], sizes = [8, 16], strides = [1, 1]} : vector<8x20xf32> to vector<8x16xf32>
    %109 = arith.addf %107, %108 : vector<8x16xf32>
    %110 = vector.extract_strided_slice %102 {offsets = [0, 4], sizes = [8, 16], strides = [1, 1]} : vector<8x20xf32> to vector<8x16xf32>
    %111 = arith.addf %109, %110 : vector<8x16xf32>
    %112 = arith.mulf %32, %29 : vector<24x20xf32>
    %113 = vector.extract_strided_slice %112 {offsets = [6, 0], sizes = [8, 20], strides = [1, 1]} : vector<24x20xf32> to vector<8x20xf32>
    %114 = vector.extract_strided_slice %112 {offsets = [7, 0], sizes = [8, 20], strides = [1, 1]} : vector<24x20xf32> to vector<8x20xf32>
    %115 = arith.addf %113, %114 : vector<8x20xf32>
    %116 = vector.extract_strided_slice %112 {offsets = [8, 0], sizes = [8, 20], strides = [1, 1]} : vector<24x20xf32> to vector<8x20xf32>
    %117 = arith.addf %115, %116 : vector<8x20xf32>
    %118 = vector.extract_strided_slice %112 {offsets = [9, 0], sizes = [8, 20], strides = [1, 1]} : vector<24x20xf32> to vector<8x20xf32>
    %119 = arith.addf %117, %118 : vector<8x20xf32>
    %120 = vector.extract_strided_slice %112 {offsets = [10, 0], sizes = [8, 20], strides = [1, 1]} : vector<24x20xf32> to vector<8x20xf32>
    %121 = arith.addf %119, %120 : vector<8x20xf32>
    %122 = vector.extract_strided_slice %121 {offsets = [0, 0], sizes = [8, 16], strides = [1, 1]} : vector<8x20xf32> to vector<8x16xf32>
    %123 = vector.extract_strided_slice %121 {offsets = [0, 1], sizes = [8, 16], strides = [1, 1]} : vector<8x20xf32> to vector<8x16xf32>
    %124 = arith.addf %122, %123 : vector<8x16xf32>
    %125 = vector.extract_strided_slice %121 {offsets = [0, 2], sizes = [8, 16], strides = [1, 1]} : vector<8x20xf32> to vector<8x16xf32>
    %126 = arith.addf %124, %125 : vector<8x16xf32>
    %127 = vector.extract_strided_slice %121 {offsets = [0, 3], sizes = [8, 16], strides = [1, 1]} : vector<8x20xf32> to vector<8x16xf32>
    %128 = arith.addf %126, %127 : vector<8x16xf32>
    %129 = vector.extract_strided_slice %121 {offsets = [0, 4], sizes = [8, 16], strides = [1, 1]} : vector<8x20xf32> to vector<8x16xf32>
    %130 = arith.addf %128, %129 : vector<8x16xf32>
    %131 = arith.mulf %35, %29 : vector<24x20xf32>
    %132 = vector.extract_strided_slice %131 {offsets = [6, 0], sizes = [8, 20], strides = [1, 1]} : vector<24x20xf32> to vector<8x20xf32>
    %133 = vector.extract_strided_slice %131 {offsets = [7, 0], sizes = [8, 20], strides = [1, 1]} : vector<24x20xf32> to vector<8x20xf32>
    %134 = arith.addf %132, %133 : vector<8x20xf32>
    %135 = vector.extract_strided_slice %131 {offsets = [8, 0], sizes = [8, 20], strides = [1, 1]} : vector<24x20xf32> to vector<8x20xf32>
    %136 = arith.addf %134, %135 : vector<8x20xf32>
    %137 = vector.extract_strided_slice %131 {offsets = [9, 0], sizes = [8, 20], strides = [1, 1]} : vector<24x20xf32> to vector<8x20xf32>
    %138 = arith.addf %136, %137 : vector<8x20xf32>
    %139 = vector.extract_strided_slice %131 {offsets = [10, 0], sizes = [8, 20], strides = [1, 1]} : vector<24x20xf32> to vector<8x20xf32>
    %140 = arith.addf %138, %139 : vector<8x20xf32>
    %141 = vector.extract_strided_slice %140 {offsets = [0, 0], sizes = [8, 16], strides = [1, 1]} : vector<8x20xf32> to vector<8x16xf32>
    %142 = vector.extract_strided_slice %140 {offsets = [0, 1], sizes = [8, 16], strides = [1, 1]} : vector<8x20xf32> to vector<8x16xf32>
    %143 = arith.addf %141, %142 : vector<8x16xf32>
    %144 = vector.extract_strided_slice %140 {offsets = [0, 2], sizes = [8, 16], strides = [1, 1]} : vector<8x20xf32> to vector<8x16xf32>
    %145 = arith.addf %143, %144 : vector<8x16xf32>
    %146 = vector.extract_strided_slice %140 {offsets = [0, 3], sizes = [8, 16], strides = [1, 1]} : vector<8x20xf32> to vector<8x16xf32>
    %147 = arith.addf %145, %146 : vector<8x16xf32>
    %148 = vector.extract_strided_slice %140 {offsets = [0, 4], sizes = [8, 16], strides = [1, 1]} : vector<8x20xf32> to vector<8x16xf32>
    %149 = arith.addf %147, %148 : vector<8x16xf32>
    %150 = vector.extract_strided_slice %32 {offsets = [6, 0], sizes = [8, 20], strides = [1, 1]} : vector<24x20xf32> to vector<8x20xf32>
    %151 = vector.extract_strided_slice %32 {offsets = [7, 0], sizes = [8, 20], strides = [1, 1]} : vector<24x20xf32> to vector<8x20xf32>
    %152 = arith.addf %150, %151 : vector<8x20xf32>
    %153 = vector.extract_strided_slice %32 {offsets = [8, 0], sizes = [8, 20], strides = [1, 1]} : vector<24x20xf32> to vector<8x20xf32>
    %154 = arith.addf %152, %153 : vector<8x20xf32>
    %155 = vector.extract_strided_slice %32 {offsets = [9, 0], sizes = [8, 20], strides = [1, 1]} : vector<24x20xf32> to vector<8x20xf32>
    %156 = arith.addf %154, %155 : vector<8x20xf32>
    %157 = vector.extract_strided_slice %32 {offsets = [10, 0], sizes = [8, 20], strides = [1, 1]} : vector<24x20xf32> to vector<8x20xf32>
    %158 = arith.addf %156, %157 : vector<8x20xf32>
    %159 = vector.extract_strided_slice %158 {offsets = [0, 0], sizes = [8, 16], strides = [1, 1]} : vector<8x20xf32> to vector<8x16xf32>
    %160 = vector.extract_strided_slice %158 {offsets = [0, 1], sizes = [8, 16], strides = [1, 1]} : vector<8x20xf32> to vector<8x16xf32>
    %161 = arith.addf %159, %160 : vector<8x16xf32>
    %162 = vector.extract_strided_slice %158 {offsets = [0, 2], sizes = [8, 16], strides = [1, 1]} : vector<8x20xf32> to vector<8x16xf32>
    %163 = arith.addf %161, %162 : vector<8x16xf32>
    %164 = vector.extract_strided_slice %158 {offsets = [0, 3], sizes = [8, 16], strides = [1, 1]} : vector<8x20xf32> to vector<8x16xf32>
    %165 = arith.addf %163, %164 : vector<8x16xf32>
    %166 = vector.extract_strided_slice %158 {offsets = [0, 4], sizes = [8, 16], strides = [1, 1]} : vector<8x20xf32> to vector<8x16xf32>
    %167 = arith.addf %165, %166 : vector<8x16xf32>
    %168 = vector.extract_strided_slice %35 {offsets = [6, 0], sizes = [8, 20], strides = [1, 1]} : vector<24x20xf32> to vector<8x20xf32>
    %169 = vector.extract_strided_slice %35 {offsets = [7, 0], sizes = [8, 20], strides = [1, 1]} : vector<24x20xf32> to vector<8x20xf32>
    %170 = arith.addf %168, %169 : vector<8x20xf32>
    %171 = vector.extract_strided_slice %35 {offsets = [8, 0], sizes = [8, 20], strides = [1, 1]} : vector<24x20xf32> to vector<8x20xf32>
    %172 = arith.addf %170, %171 : vector<8x20xf32>
    %173 = vector.extract_strided_slice %35 {offsets = [9, 0], sizes = [8, 20], strides = [1, 1]} : vector<24x20xf32> to vector<8x20xf32>
    %174 = arith.addf %172, %173 : vector<8x20xf32>
    %175 = vector.extract_strided_slice %35 {offsets = [10, 0], sizes = [8, 20], strides = [1, 1]} : vector<24x20xf32> to vector<8x20xf32>
    %176 = arith.addf %174, %175 : vector<8x20xf32>
    %177 = vector.extract_strided_slice %176 {offsets = [0, 0], sizes = [8, 16], strides = [1, 1]} : vector<8x20xf32> to vector<8x16xf32>
    %178 = vector.extract_strided_slice %176 {offsets = [0, 1], sizes = [8, 16], strides = [1, 1]} : vector<8x20xf32> to vector<8x16xf32>
    %179 = arith.addf %177, %178 : vector<8x16xf32>
    %180 = vector.extract_strided_slice %176 {offsets = [0, 2], sizes = [8, 16], strides = [1, 1]} : vector<8x20xf32> to vector<8x16xf32>
    %181 = arith.addf %179, %180 : vector<8x16xf32>
    %182 = vector.extract_strided_slice %176 {offsets = [0, 3], sizes = [8, 16], strides = [1, 1]} : vector<8x20xf32> to vector<8x16xf32>
    %183 = arith.addf %181, %182 : vector<8x16xf32>
    %184 = vector.extract_strided_slice %176 {offsets = [0, 4], sizes = [8, 16], strides = [1, 1]} : vector<8x20xf32> to vector<8x16xf32>
    %185 = arith.addf %183, %184 : vector<8x16xf32>
    %186 = vector.extract_strided_slice %29 {offsets = [6, 0], sizes = [8, 20], strides = [1, 1]} : vector<24x20xf32> to vector<8x20xf32>
    %187 = vector.extract_strided_slice %29 {offsets = [7, 0], sizes = [8, 20], strides = [1, 1]} : vector<24x20xf32> to vector<8x20xf32>
    %188 = arith.addf %186, %187 : vector<8x20xf32>
    %189 = vector.extract_strided_slice %29 {offsets = [8, 0], sizes = [8, 20], strides = [1, 1]} : vector<24x20xf32> to vector<8x20xf32>
    %190 = arith.addf %188, %189 : vector<8x20xf32>
    %191 = vector.extract_strided_slice %29 {offsets = [9, 0], sizes = [8, 20], strides = [1, 1]} : vector<24x20xf32> to vector<8x20xf32>
    %192 = arith.addf %190, %191 : vector<8x20xf32>
    %193 = vector.extract_strided_slice %29 {offsets = [10, 0], sizes = [8, 20], strides = [1, 1]} : vector<24x20xf32> to vector<8x20xf32>
    %194 = arith.addf %192, %193 : vector<8x20xf32>
    %195 = vector.extract_strided_slice %194 {offsets = [0, 0], sizes = [8, 16], strides = [1, 1]} : vector<8x20xf32> to vector<8x16xf32>
    %196 = vector.extract_strided_slice %194 {offsets = [0, 1], sizes = [8, 16], strides = [1, 1]} : vector<8x20xf32> to vector<8x16xf32>
    %197 = arith.addf %195, %196 : vector<8x16xf32>
    %198 = vector.extract_strided_slice %194 {offsets = [0, 2], sizes = [8, 16], strides = [1, 1]} : vector<8x20xf32> to vector<8x16xf32>
    %199 = arith.addf %197, %198 : vector<8x16xf32>
    %200 = vector.extract_strided_slice %194 {offsets = [0, 3], sizes = [8, 16], strides = [1, 1]} : vector<8x20xf32> to vector<8x16xf32>
    %201 = arith.addf %199, %200 : vector<8x16xf32>
    %202 = vector.extract_strided_slice %194 {offsets = [0, 4], sizes = [8, 16], strides = [1, 1]} : vector<8x20xf32> to vector<8x16xf32>
    %203 = arith.addf %201, %202 : vector<8x16xf32>
    %cst_12 = arith.constant 9.99999997E-7 : f32
    %204 = vector.broadcast %cst_12 : f32 to vector<8x16xf32>
    %205 = arith.addf %54, %204 : vector<8x16xf32>
    %cst_13 = arith.constant 9.99999997E-7 : f32
    %206 = vector.broadcast %cst_13 : f32 to vector<8x16xf32>
    %207 = arith.addf %73, %206 : vector<8x16xf32>
    %cst_14 = arith.constant 9.99999997E-7 : f32
    %208 = vector.broadcast %cst_14 : f32 to vector<8x16xf32>
    %209 = arith.addf %92, %208 : vector<8x16xf32>
    %210 = arith.mulf %207, %209 : vector<8x16xf32>
    %211 = arith.mulf %149, %149 : vector<8x16xf32>
    %212 = arith.subf %210, %211 : vector<8x16xf32>
    %213 = arith.mulf %130, %149 : vector<8x16xf32>
    %214 = arith.mulf %111, %209 : vector<8x16xf32>
    %215 = arith.subf %213, %214 : vector<8x16xf32>
    %216 = arith.mulf %111, %149 : vector<8x16xf32>
    %217 = arith.mulf %130, %207 : vector<8x16xf32>
    %218 = arith.subf %216, %217 : vector<8x16xf32>
    %219 = arith.mulf %205, %209 : vector<8x16xf32>
    %220 = arith.mulf %130, %130 : vector<8x16xf32>
    %221 = arith.subf %219, %220 : vector<8x16xf32>
    %222 = arith.mulf %111, %130 : vector<8x16xf32>
    %223 = arith.mulf %205, %149 : vector<8x16xf32>
    %224 = arith.subf %222, %223 : vector<8x16xf32>
    %225 = arith.mulf %205, %207 : vector<8x16xf32>
    %226 = arith.mulf %111, %111 : vector<8x16xf32>
    %227 = arith.subf %225, %226 : vector<8x16xf32>
    %228 = arith.mulf %205, %212 : vector<8x16xf32>
    %229 = arith.mulf %111, %215 : vector<8x16xf32>
    %230 = arith.addf %228, %229 : vector<8x16xf32>
    %231 = arith.mulf %130, %218 : vector<8x16xf32>
    %232 = arith.addf %230, %231 : vector<8x16xf32>
    %cst_15 = arith.constant 1.000000e+00 : f32
    %233 = vector.broadcast %cst_15 : f32 to vector<8x16xf32>
    %234 = arith.divf %233, %232 : vector<8x16xf32>
    %235 = arith.mulf %212, %167 : vector<8x16xf32>
    %236 = arith.mulf %215, %185 : vector<8x16xf32>
    %237 = arith.addf %235, %236 : vector<8x16xf32>
    %238 = arith.mulf %218, %203 : vector<8x16xf32>
    %239 = arith.addf %237, %238 : vector<8x16xf32>
    %240 = arith.mulf %239, %234 : vector<8x16xf32>
    %241 = arith.mulf %215, %167 : vector<8x16xf32>
    %242 = arith.mulf %221, %185 : vector<8x16xf32>
    %243 = arith.addf %241, %242 : vector<8x16xf32>
    %244 = arith.mulf %224, %203 : vector<8x16xf32>
    %245 = arith.addf %243, %244 : vector<8x16xf32>
    %246 = arith.mulf %245, %234 : vector<8x16xf32>
    %247 = arith.mulf %218, %167 : vector<8x16xf32>
    %248 = arith.mulf %224, %185 : vector<8x16xf32>
    %249 = arith.addf %247, %248 : vector<8x16xf32>
    %250 = arith.mulf %227, %203 : vector<8x16xf32>
    %251 = arith.addf %249, %250 : vector<8x16xf32>
    %252 = arith.mulf %251, %234 : vector<8x16xf32>
    %253 = arith.mulf %240, %240 : vector<8x16xf32>
    %254 = arith.mulf %246, %246 : vector<8x16xf32>
    %255 = arith.addf %253, %254 : vector<8x16xf32>
    %256 = arith.mulf %252, %252 : vector<8x16xf32>
    %257 = arith.addf %255, %256 : vector<8x16xf32>
    %258 = math.rsqrt %257 : vector<8x16xf32>
    %259 = arith.mulf %240, %258 : vector<8x16xf32>
    %260 = arith.mulf %246, %258 : vector<8x16xf32>
    %261 = arith.mulf %252, %258 : vector<8x16xf32>
    %262 = vector.extract_strided_slice %32 {offsets = [8, 2], sizes = [8, 16], strides = [1, 1]} : vector<24x20xf32> to vector<8x16xf32>
    %263 = vector.extract_strided_slice %35 {offsets = [8, 2], sizes = [8, 16], strides = [1, 1]} : vector<24x20xf32> to vector<8x16xf32>
    %264 = vector.extract_strided_slice %20 {offsets = [0, 2], sizes = [8, 16], strides = [1, 1]} : vector<8x20xf32> to vector<8x16xf32>
    %265 = arith.mulf %259, %262 : vector<8x16xf32>
    %266 = arith.mulf %260, %263 : vector<8x16xf32>
    %267 = arith.addf %265, %266 : vector<8x16xf32>
    %268 = arith.mulf %261, %264 : vector<8x16xf32>
    %269 = arith.addf %267, %268 : vector<8x16xf32>
    %cst_16 = arith.constant 0.000000e+00 : f32
    %270 = vector.broadcast %cst_16 : f32 to vector<8x16xf32>
    %271 = arith.cmpf ogt, %269, %270 : vector<8x16xf32>
    %cst_17 = arith.constant -1.000000e+00 : f32
    %cst_18 = arith.constant 1.000000e+00 : f32
    %272 = vector.broadcast %cst_17 : f32 to vector<8x16xf32>
    %273 = vector.broadcast %cst_18 : f32 to vector<8x16xf32>
    %274 = arith.select %271, %272, %273 : vector<8x16xi1>, vector<8x16xf32>
    %275 = arith.mulf %259, %274 : vector<8x16xf32>
    %276 = arith.mulf %260, %274 : vector<8x16xf32>
    %277 = arith.mulf %261, %274 : vector<8x16xf32>
    %cst_19 = arith.constant 0.000000e+00 : f32
    %278 = vector.broadcast %cst_19 : f32 to vector<8x16xf32>
    %279 = arith.cmpf ogt, %264, %278 : vector<8x16xf32>
    %cst_20 = arith.constant 0.000000e+00 : f32
    %280 = vector.broadcast %cst_20 : f32 to vector<8x16xf32>
    %281 = arith.select %279, %275, %280 : vector<8x16xi1>, vector<8x16xf32>
    %282 = arith.select %279, %276, %280 : vector<8x16xi1>, vector<8x16xf32>
    %283 = arith.select %279, %277, %280 : vector<8x16xi1>, vector<8x16xf32>
    %c0_21 = arith.constant 0 : index
    %c0_22 = arith.constant 0 : index
    %c0_23 = arith.constant 0 : index
    %284 = vector.load %arg3[%c0_21, %c0_22, %c0_23] : memref<1x8x20xf32, #tpu.memory_space<vmem>>, vector<1x8x20xf32>
    %285 = vector.shape_cast %284 : vector<1x8x20xf32> to vector<8x20xf32>
    %c0_24 = arith.constant 0 : index
    %c0_25 = arith.constant 0 : index
    %c0_26 = arith.constant 0 : index
    %286 = vector.load %arg2[%c0_24, %c0_25, %c0_26] : memref<1x8x20xf32, #tpu.memory_space<vmem>>, vector<1x8x20xf32>
    %287 = vector.shape_cast %286 : vector<1x8x20xf32> to vector<8x20xf32>
    %288 = vector.broadcast %2 : f32 to vector<8x20xf32>
    %289 = arith.mulf %287, %288 : vector<8x20xf32>
    %c0_27 = arith.constant 0 : index
    %c0_28 = arith.constant 0 : index
    %c0_29 = arith.constant 0 : index
    %290 = vector.load %arg4[%c0_27, %c0_28, %c0_29] : memref<1x8x20xf32, #tpu.memory_space<vmem>>, vector<1x8x20xf32>
    %291 = vector.shape_cast %290 : vector<1x8x20xf32> to vector<8x20xf32>
    %292 = vector.broadcast %5 : f32 to vector<8x20xf32>
    %293 = arith.mulf %291, %292 : vector<8x20xf32>
    %294 = tpu.concatenate %289, %285, %293 in 0 : vector<8x20xf32>, vector<8x20xf32>, vector<8x20xf32> -> vector<24x20xf32>
    %295 = arith.mulf %18, %294 : vector<24x20xf32>
    %cst_30 = arith.constant 1.250000e-01 : f32
    %296 = vector.broadcast %cst_30 : f32 to vector<24x20xf32>
    %297 = arith.mulf %295, %296 : vector<24x20xf32>
    %298 = arith.mulf %15, %294 : vector<24x20xf32>
    %cst_31 = arith.constant 1.250000e-01 : f32
    %299 = vector.broadcast %cst_31 : f32 to vector<24x20xf32>
    %300 = arith.mulf %298, %299 : vector<24x20xf32>
    %301 = arith.mulf %297, %297 : vector<24x20xf32>
    %302 = vector.extract_strided_slice %301 {offsets = [6, 0], sizes = [8, 20], strides = [1, 1]} : vector<24x20xf32> to vector<8x20xf32>
    %303 = vector.extract_strided_slice %301 {offsets = [7, 0], sizes = [8, 20], strides = [1, 1]} : vector<24x20xf32> to vector<8x20xf32>
    %304 = arith.addf %302, %303 : vector<8x20xf32>
    %305 = vector.extract_strided_slice %301 {offsets = [8, 0], sizes = [8, 20], strides = [1, 1]} : vector<24x20xf32> to vector<8x20xf32>
    %306 = arith.addf %304, %305 : vector<8x20xf32>
    %307 = vector.extract_strided_slice %301 {offsets = [9, 0], sizes = [8, 20], strides = [1, 1]} : vector<24x20xf32> to vector<8x20xf32>
    %308 = arith.addf %306, %307 : vector<8x20xf32>
    %309 = vector.extract_strided_slice %301 {offsets = [10, 0], sizes = [8, 20], strides = [1, 1]} : vector<24x20xf32> to vector<8x20xf32>
    %310 = arith.addf %308, %309 : vector<8x20xf32>
    %311 = vector.extract_strided_slice %310 {offsets = [0, 0], sizes = [8, 16], strides = [1, 1]} : vector<8x20xf32> to vector<8x16xf32>
    %312 = vector.extract_strided_slice %310 {offsets = [0, 1], sizes = [8, 16], strides = [1, 1]} : vector<8x20xf32> to vector<8x16xf32>
    %313 = arith.addf %311, %312 : vector<8x16xf32>
    %314 = vector.extract_strided_slice %310 {offsets = [0, 2], sizes = [8, 16], strides = [1, 1]} : vector<8x20xf32> to vector<8x16xf32>
    %315 = arith.addf %313, %314 : vector<8x16xf32>
    %316 = vector.extract_strided_slice %310 {offsets = [0, 3], sizes = [8, 16], strides = [1, 1]} : vector<8x20xf32> to vector<8x16xf32>
    %317 = arith.addf %315, %316 : vector<8x16xf32>
    %318 = vector.extract_strided_slice %310 {offsets = [0, 4], sizes = [8, 16], strides = [1, 1]} : vector<8x20xf32> to vector<8x16xf32>
    %319 = arith.addf %317, %318 : vector<8x16xf32>
    %320 = arith.mulf %300, %300 : vector<24x20xf32>
    %321 = vector.extract_strided_slice %320 {offsets = [6, 0], sizes = [8, 20], strides = [1, 1]} : vector<24x20xf32> to vector<8x20xf32>
    %322 = vector.extract_strided_slice %320 {offsets = [7, 0], sizes = [8, 20], strides = [1, 1]} : vector<24x20xf32> to vector<8x20xf32>
    %323 = arith.addf %321, %322 : vector<8x20xf32>
    %324 = vector.extract_strided_slice %320 {offsets = [8, 0], sizes = [8, 20], strides = [1, 1]} : vector<24x20xf32> to vector<8x20xf32>
    %325 = arith.addf %323, %324 : vector<8x20xf32>
    %326 = vector.extract_strided_slice %320 {offsets = [9, 0], sizes = [8, 20], strides = [1, 1]} : vector<24x20xf32> to vector<8x20xf32>
    %327 = arith.addf %325, %326 : vector<8x20xf32>
    %328 = vector.extract_strided_slice %320 {offsets = [10, 0], sizes = [8, 20], strides = [1, 1]} : vector<24x20xf32> to vector<8x20xf32>
    %329 = arith.addf %327, %328 : vector<8x20xf32>
    %330 = vector.extract_strided_slice %329 {offsets = [0, 0], sizes = [8, 16], strides = [1, 1]} : vector<8x20xf32> to vector<8x16xf32>
    %331 = vector.extract_strided_slice %329 {offsets = [0, 1], sizes = [8, 16], strides = [1, 1]} : vector<8x20xf32> to vector<8x16xf32>
    %332 = arith.addf %330, %331 : vector<8x16xf32>
    %333 = vector.extract_strided_slice %329 {offsets = [0, 2], sizes = [8, 16], strides = [1, 1]} : vector<8x20xf32> to vector<8x16xf32>
    %334 = arith.addf %332, %333 : vector<8x16xf32>
    %335 = vector.extract_strided_slice %329 {offsets = [0, 3], sizes = [8, 16], strides = [1, 1]} : vector<8x20xf32> to vector<8x16xf32>
    %336 = arith.addf %334, %335 : vector<8x16xf32>
    %337 = vector.extract_strided_slice %329 {offsets = [0, 4], sizes = [8, 16], strides = [1, 1]} : vector<8x20xf32> to vector<8x16xf32>
    %338 = arith.addf %336, %337 : vector<8x16xf32>
    %339 = arith.mulf %294, %294 : vector<24x20xf32>
    %340 = vector.extract_strided_slice %339 {offsets = [6, 0], sizes = [8, 20], strides = [1, 1]} : vector<24x20xf32> to vector<8x20xf32>
    %341 = vector.extract_strided_slice %339 {offsets = [7, 0], sizes = [8, 20], strides = [1, 1]} : vector<24x20xf32> to vector<8x20xf32>
    %342 = arith.addf %340, %341 : vector<8x20xf32>
    %343 = vector.extract_strided_slice %339 {offsets = [8, 0], sizes = [8, 20], strides = [1, 1]} : vector<24x20xf32> to vector<8x20xf32>
    %344 = arith.addf %342, %343 : vector<8x20xf32>
    %345 = vector.extract_strided_slice %339 {offsets = [9, 0], sizes = [8, 20], strides = [1, 1]} : vector<24x20xf32> to vector<8x20xf32>
    %346 = arith.addf %344, %345 : vector<8x20xf32>
    %347 = vector.extract_strided_slice %339 {offsets = [10, 0], sizes = [8, 20], strides = [1, 1]} : vector<24x20xf32> to vector<8x20xf32>
    %348 = arith.addf %346, %347 : vector<8x20xf32>
    %349 = vector.extract_strided_slice %348 {offsets = [0, 0], sizes = [8, 16], strides = [1, 1]} : vector<8x20xf32> to vector<8x16xf32>
    %350 = vector.extract_strided_slice %348 {offsets = [0, 1], sizes = [8, 16], strides = [1, 1]} : vector<8x20xf32> to vector<8x16xf32>
    %351 = arith.addf %349, %350 : vector<8x16xf32>
    %352 = vector.extract_strided_slice %348 {offsets = [0, 2], sizes = [8, 16], strides = [1, 1]} : vector<8x20xf32> to vector<8x16xf32>
    %353 = arith.addf %351, %352 : vector<8x16xf32>
    %354 = vector.extract_strided_slice %348 {offsets = [0, 3], sizes = [8, 16], strides = [1, 1]} : vector<8x20xf32> to vector<8x16xf32>
    %355 = arith.addf %353, %354 : vector<8x16xf32>
    %356 = vector.extract_strided_slice %348 {offsets = [0, 4], sizes = [8, 16], strides = [1, 1]} : vector<8x20xf32> to vector<8x16xf32>
    %357 = arith.addf %355, %356 : vector<8x16xf32>
    %358 = arith.mulf %297, %300 : vector<24x20xf32>
    %359 = vector.extract_strided_slice %358 {offsets = [6, 0], sizes = [8, 20], strides = [1, 1]} : vector<24x20xf32> to vector<8x20xf32>
    %360 = vector.extract_strided_slice %358 {offsets = [7, 0], sizes = [8, 20], strides = [1, 1]} : vector<24x20xf32> to vector<8x20xf32>
    %361 = arith.addf %359, %360 : vector<8x20xf32>
    %362 = vector.extract_strided_slice %358 {offsets = [8, 0], sizes = [8, 20], strides = [1, 1]} : vector<24x20xf32> to vector<8x20xf32>
    %363 = arith.addf %361, %362 : vector<8x20xf32>
    %364 = vector.extract_strided_slice %358 {offsets = [9, 0], sizes = [8, 20], strides = [1, 1]} : vector<24x20xf32> to vector<8x20xf32>
    %365 = arith.addf %363, %364 : vector<8x20xf32>
    %366 = vector.extract_strided_slice %358 {offsets = [10, 0], sizes = [8, 20], strides = [1, 1]} : vector<24x20xf32> to vector<8x20xf32>
    %367 = arith.addf %365, %366 : vector<8x20xf32>
    %368 = vector.extract_strided_slice %367 {offsets = [0, 0], sizes = [8, 16], strides = [1, 1]} : vector<8x20xf32> to vector<8x16xf32>
    %369 = vector.extract_strided_slice %367 {offsets = [0, 1], sizes = [8, 16], strides = [1, 1]} : vector<8x20xf32> to vector<8x16xf32>
    %370 = arith.addf %368, %369 : vector<8x16xf32>
    %371 = vector.extract_strided_slice %367 {offsets = [0, 2], sizes = [8, 16], strides = [1, 1]} : vector<8x20xf32> to vector<8x16xf32>
    %372 = arith.addf %370, %371 : vector<8x16xf32>
    %373 = vector.extract_strided_slice %367 {offsets = [0, 3], sizes = [8, 16], strides = [1, 1]} : vector<8x20xf32> to vector<8x16xf32>
    %374 = arith.addf %372, %373 : vector<8x16xf32>
    %375 = vector.extract_strided_slice %367 {offsets = [0, 4], sizes = [8, 16], strides = [1, 1]} : vector<8x20xf32> to vector<8x16xf32>
    %376 = arith.addf %374, %375 : vector<8x16xf32>
    %377 = arith.mulf %297, %294 : vector<24x20xf32>
    %378 = vector.extract_strided_slice %377 {offsets = [6, 0], sizes = [8, 20], strides = [1, 1]} : vector<24x20xf32> to vector<8x20xf32>
    %379 = vector.extract_strided_slice %377 {offsets = [7, 0], sizes = [8, 20], strides = [1, 1]} : vector<24x20xf32> to vector<8x20xf32>
    %380 = arith.addf %378, %379 : vector<8x20xf32>
    %381 = vector.extract_strided_slice %377 {offsets = [8, 0], sizes = [8, 20], strides = [1, 1]} : vector<24x20xf32> to vector<8x20xf32>
    %382 = arith.addf %380, %381 : vector<8x20xf32>
    %383 = vector.extract_strided_slice %377 {offsets = [9, 0], sizes = [8, 20], strides = [1, 1]} : vector<24x20xf32> to vector<8x20xf32>
    %384 = arith.addf %382, %383 : vector<8x20xf32>
    %385 = vector.extract_strided_slice %377 {offsets = [10, 0], sizes = [8, 20], strides = [1, 1]} : vector<24x20xf32> to vector<8x20xf32>
    %386 = arith.addf %384, %385 : vector<8x20xf32>
    %387 = vector.extract_strided_slice %386 {offsets = [0, 0], sizes = [8, 16], strides = [1, 1]} : vector<8x20xf32> to vector<8x16xf32>
    %388 = vector.extract_strided_slice %386 {offsets = [0, 1], sizes = [8, 16], strides = [1, 1]} : vector<8x20xf32> to vector<8x16xf32>
    %389 = arith.addf %387, %388 : vector<8x16xf32>
    %390 = vector.extract_strided_slice %386 {offsets = [0, 2], sizes = [8, 16], strides = [1, 1]} : vector<8x20xf32> to vector<8x16xf32>
    %391 = arith.addf %389, %390 : vector<8x16xf32>
    %392 = vector.extract_strided_slice %386 {offsets = [0, 3], sizes = [8, 16], strides = [1, 1]} : vector<8x20xf32> to vector<8x16xf32>
    %393 = arith.addf %391, %392 : vector<8x16xf32>
    %394 = vector.extract_strided_slice %386 {offsets = [0, 4], sizes = [8, 16], strides = [1, 1]} : vector<8x20xf32> to vector<8x16xf32>
    %395 = arith.addf %393, %394 : vector<8x16xf32>
    %396 = arith.mulf %300, %294 : vector<24x20xf32>
    %397 = vector.extract_strided_slice %396 {offsets = [6, 0], sizes = [8, 20], strides = [1, 1]} : vector<24x20xf32> to vector<8x20xf32>
    %398 = vector.extract_strided_slice %396 {offsets = [7, 0], sizes = [8, 20], strides = [1, 1]} : vector<24x20xf32> to vector<8x20xf32>
    %399 = arith.addf %397, %398 : vector<8x20xf32>
    %400 = vector.extract_strided_slice %396 {offsets = [8, 0], sizes = [8, 20], strides = [1, 1]} : vector<24x20xf32> to vector<8x20xf32>
    %401 = arith.addf %399, %400 : vector<8x20xf32>
    %402 = vector.extract_strided_slice %396 {offsets = [9, 0], sizes = [8, 20], strides = [1, 1]} : vector<24x20xf32> to vector<8x20xf32>
    %403 = arith.addf %401, %402 : vector<8x20xf32>
    %404 = vector.extract_strided_slice %396 {offsets = [10, 0], sizes = [8, 20], strides = [1, 1]} : vector<24x20xf32> to vector<8x20xf32>
    %405 = arith.addf %403, %404 : vector<8x20xf32>
    %406 = vector.extract_strided_slice %405 {offsets = [0, 0], sizes = [8, 16], strides = [1, 1]} : vector<8x20xf32> to vector<8x16xf32>
    %407 = vector.extract_strided_slice %405 {offsets = [0, 1], sizes = [8, 16], strides = [1, 1]} : vector<8x20xf32> to vector<8x16xf32>
    %408 = arith.addf %406, %407 : vector<8x16xf32>
    %409 = vector.extract_strided_slice %405 {offsets = [0, 2], sizes = [8, 16], strides = [1, 1]} : vector<8x20xf32> to vector<8x16xf32>
    %410 = arith.addf %408, %409 : vector<8x16xf32>
    %411 = vector.extract_strided_slice %405 {offsets = [0, 3], sizes = [8, 16], strides = [1, 1]} : vector<8x20xf32> to vector<8x16xf32>
    %412 = arith.addf %410, %411 : vector<8x16xf32>
    %413 = vector.extract_strided_slice %405 {offsets = [0, 4], sizes = [8, 16], strides = [1, 1]} : vector<8x20xf32> to vector<8x16xf32>
    %414 = arith.addf %412, %413 : vector<8x16xf32>
    %415 = vector.extract_strided_slice %297 {offsets = [6, 0], sizes = [8, 20], strides = [1, 1]} : vector<24x20xf32> to vector<8x20xf32>
    %416 = vector.extract_strided_slice %297 {offsets = [7, 0], sizes = [8, 20], strides = [1, 1]} : vector<24x20xf32> to vector<8x20xf32>
    %417 = arith.addf %415, %416 : vector<8x20xf32>
    %418 = vector.extract_strided_slice %297 {offsets = [8, 0], sizes = [8, 20], strides = [1, 1]} : vector<24x20xf32> to vector<8x20xf32>
    %419 = arith.addf %417, %418 : vector<8x20xf32>
    %420 = vector.extract_strided_slice %297 {offsets = [9, 0], sizes = [8, 20], strides = [1, 1]} : vector<24x20xf32> to vector<8x20xf32>
    %421 = arith.addf %419, %420 : vector<8x20xf32>
    %422 = vector.extract_strided_slice %297 {offsets = [10, 0], sizes = [8, 20], strides = [1, 1]} : vector<24x20xf32> to vector<8x20xf32>
    %423 = arith.addf %421, %422 : vector<8x20xf32>
    %424 = vector.extract_strided_slice %423 {offsets = [0, 0], sizes = [8, 16], strides = [1, 1]} : vector<8x20xf32> to vector<8x16xf32>
    %425 = vector.extract_strided_slice %423 {offsets = [0, 1], sizes = [8, 16], strides = [1, 1]} : vector<8x20xf32> to vector<8x16xf32>
    %426 = arith.addf %424, %425 : vector<8x16xf32>
    %427 = vector.extract_strided_slice %423 {offsets = [0, 2], sizes = [8, 16], strides = [1, 1]} : vector<8x20xf32> to vector<8x16xf32>
    %428 = arith.addf %426, %427 : vector<8x16xf32>
    %429 = vector.extract_strided_slice %423 {offsets = [0, 3], sizes = [8, 16], strides = [1, 1]} : vector<8x20xf32> to vector<8x16xf32>
    %430 = arith.addf %428, %429 : vector<8x16xf32>
    %431 = vector.extract_strided_slice %423 {offsets = [0, 4], sizes = [8, 16], strides = [1, 1]} : vector<8x20xf32> to vector<8x16xf32>
    %432 = arith.addf %430, %431 : vector<8x16xf32>
    %433 = vector.extract_strided_slice %300 {offsets = [6, 0], sizes = [8, 20], strides = [1, 1]} : vector<24x20xf32> to vector<8x20xf32>
    %434 = vector.extract_strided_slice %300 {offsets = [7, 0], sizes = [8, 20], strides = [1, 1]} : vector<24x20xf32> to vector<8x20xf32>
    %435 = arith.addf %433, %434 : vector<8x20xf32>
    %436 = vector.extract_strided_slice %300 {offsets = [8, 0], sizes = [8, 20], strides = [1, 1]} : vector<24x20xf32> to vector<8x20xf32>
    %437 = arith.addf %435, %436 : vector<8x20xf32>
    %438 = vector.extract_strided_slice %300 {offsets = [9, 0], sizes = [8, 20], strides = [1, 1]} : vector<24x20xf32> to vector<8x20xf32>
    %439 = arith.addf %437, %438 : vector<8x20xf32>
    %440 = vector.extract_strided_slice %300 {offsets = [10, 0], sizes = [8, 20], strides = [1, 1]} : vector<24x20xf32> to vector<8x20xf32>
    %441 = arith.addf %439, %440 : vector<8x20xf32>
    %442 = vector.extract_strided_slice %441 {offsets = [0, 0], sizes = [8, 16], strides = [1, 1]} : vector<8x20xf32> to vector<8x16xf32>
    %443 = vector.extract_strided_slice %441 {offsets = [0, 1], sizes = [8, 16], strides = [1, 1]} : vector<8x20xf32> to vector<8x16xf32>
    %444 = arith.addf %442, %443 : vector<8x16xf32>
    %445 = vector.extract_strided_slice %441 {offsets = [0, 2], sizes = [8, 16], strides = [1, 1]} : vector<8x20xf32> to vector<8x16xf32>
    %446 = arith.addf %444, %445 : vector<8x16xf32>
    %447 = vector.extract_strided_slice %441 {offsets = [0, 3], sizes = [8, 16], strides = [1, 1]} : vector<8x20xf32> to vector<8x16xf32>
    %448 = arith.addf %446, %447 : vector<8x16xf32>
    %449 = vector.extract_strided_slice %441 {offsets = [0, 4], sizes = [8, 16], strides = [1, 1]} : vector<8x20xf32> to vector<8x16xf32>
    %450 = arith.addf %448, %449 : vector<8x16xf32>
    %451 = vector.extract_strided_slice %294 {offsets = [6, 0], sizes = [8, 20], strides = [1, 1]} : vector<24x20xf32> to vector<8x20xf32>
    %452 = vector.extract_strided_slice %294 {offsets = [7, 0], sizes = [8, 20], strides = [1, 1]} : vector<24x20xf32> to vector<8x20xf32>
    %453 = arith.addf %451, %452 : vector<8x20xf32>
    %454 = vector.extract_strided_slice %294 {offsets = [8, 0], sizes = [8, 20], strides = [1, 1]} : vector<24x20xf32> to vector<8x20xf32>
    %455 = arith.addf %453, %454 : vector<8x20xf32>
    %456 = vector.extract_strided_slice %294 {offsets = [9, 0], sizes = [8, 20], strides = [1, 1]} : vector<24x20xf32> to vector<8x20xf32>
    %457 = arith.addf %455, %456 : vector<8x20xf32>
    %458 = vector.extract_strided_slice %294 {offsets = [10, 0], sizes = [8, 20], strides = [1, 1]} : vector<24x20xf32> to vector<8x20xf32>
    %459 = arith.addf %457, %458 : vector<8x20xf32>
    %460 = vector.extract_strided_slice %459 {offsets = [0, 0], sizes = [8, 16], strides = [1, 1]} : vector<8x20xf32> to vector<8x16xf32>
    %461 = vector.extract_strided_slice %459 {offsets = [0, 1], sizes = [8, 16], strides = [1, 1]} : vector<8x20xf32> to vector<8x16xf32>
    %462 = arith.addf %460, %461 : vector<8x16xf32>
    %463 = vector.extract_strided_slice %459 {offsets = [0, 2], sizes = [8, 16], strides = [1, 1]} : vector<8x20xf32> to vector<8x16xf32>
    %464 = arith.addf %462, %463 : vector<8x16xf32>
    %465 = vector.extract_strided_slice %459 {offsets = [0, 3], sizes = [8, 16], strides = [1, 1]} : vector<8x20xf32> to vector<8x16xf32>
    %466 = arith.addf %464, %465 : vector<8x16xf32>
    %467 = vector.extract_strided_slice %459 {offsets = [0, 4], sizes = [8, 16], strides = [1, 1]} : vector<8x20xf32> to vector<8x16xf32>
    %468 = arith.addf %466, %467 : vector<8x16xf32>
    %cst_32 = arith.constant 9.99999997E-7 : f32
    %469 = vector.broadcast %cst_32 : f32 to vector<8x16xf32>
    %470 = arith.addf %319, %469 : vector<8x16xf32>
    %cst_33 = arith.constant 9.99999997E-7 : f32
    %471 = vector.broadcast %cst_33 : f32 to vector<8x16xf32>
    %472 = arith.addf %338, %471 : vector<8x16xf32>
    %cst_34 = arith.constant 9.99999997E-7 : f32
    %473 = vector.broadcast %cst_34 : f32 to vector<8x16xf32>
    %474 = arith.addf %357, %473 : vector<8x16xf32>
    %475 = arith.mulf %472, %474 : vector<8x16xf32>
    %476 = arith.mulf %414, %414 : vector<8x16xf32>
    %477 = arith.subf %475, %476 : vector<8x16xf32>
    %478 = arith.mulf %395, %414 : vector<8x16xf32>
    %479 = arith.mulf %376, %474 : vector<8x16xf32>
    %480 = arith.subf %478, %479 : vector<8x16xf32>
    %481 = arith.mulf %376, %414 : vector<8x16xf32>
    %482 = arith.mulf %395, %472 : vector<8x16xf32>
    %483 = arith.subf %481, %482 : vector<8x16xf32>
    %484 = arith.mulf %470, %474 : vector<8x16xf32>
    %485 = arith.mulf %395, %395 : vector<8x16xf32>
    %486 = arith.subf %484, %485 : vector<8x16xf32>
    %487 = arith.mulf %376, %395 : vector<8x16xf32>
    %488 = arith.mulf %470, %414 : vector<8x16xf32>
    %489 = arith.subf %487, %488 : vector<8x16xf32>
    %490 = arith.mulf %470, %472 : vector<8x16xf32>
    %491 = arith.mulf %376, %376 : vector<8x16xf32>
    %492 = arith.subf %490, %491 : vector<8x16xf32>
    %493 = arith.mulf %470, %477 : vector<8x16xf32>
    %494 = arith.mulf %376, %480 : vector<8x16xf32>
    %495 = arith.addf %493, %494 : vector<8x16xf32>
    %496 = arith.mulf %395, %483 : vector<8x16xf32>
    %497 = arith.addf %495, %496 : vector<8x16xf32>
    %cst_35 = arith.constant 1.000000e+00 : f32
    %498 = vector.broadcast %cst_35 : f32 to vector<8x16xf32>
    %499 = arith.divf %498, %497 : vector<8x16xf32>
    %500 = arith.mulf %477, %432 : vector<8x16xf32>
    %501 = arith.mulf %480, %450 : vector<8x16xf32>
    %502 = arith.addf %500, %501 : vector<8x16xf32>
    %503 = arith.mulf %483, %468 : vector<8x16xf32>
    %504 = arith.addf %502, %503 : vector<8x16xf32>
    %505 = arith.mulf %504, %499 : vector<8x16xf32>
    %506 = arith.mulf %480, %432 : vector<8x16xf32>
    %507 = arith.mulf %486, %450 : vector<8x16xf32>
    %508 = arith.addf %506, %507 : vector<8x16xf32>
    %509 = arith.mulf %489, %468 : vector<8x16xf32>
    %510 = arith.addf %508, %509 : vector<8x16xf32>
    %511 = arith.mulf %510, %499 : vector<8x16xf32>
    %512 = arith.mulf %483, %432 : vector<8x16xf32>
    %513 = arith.mulf %489, %450 : vector<8x16xf32>
    %514 = arith.addf %512, %513 : vector<8x16xf32>
    %515 = arith.mulf %492, %468 : vector<8x16xf32>
    %516 = arith.addf %514, %515 : vector<8x16xf32>
    %517 = arith.mulf %516, %499 : vector<8x16xf32>
    %518 = arith.mulf %505, %505 : vector<8x16xf32>
    %519 = arith.mulf %511, %511 : vector<8x16xf32>
    %520 = arith.addf %518, %519 : vector<8x16xf32>
    %521 = arith.mulf %517, %517 : vector<8x16xf32>
    %522 = arith.addf %520, %521 : vector<8x16xf32>
    %523 = math.rsqrt %522 : vector<8x16xf32>
    %524 = arith.mulf %505, %523 : vector<8x16xf32>
    %525 = arith.mulf %511, %523 : vector<8x16xf32>
    %526 = arith.mulf %517, %523 : vector<8x16xf32>
    %527 = vector.extract_strided_slice %297 {offsets = [8, 2], sizes = [8, 16], strides = [1, 1]} : vector<24x20xf32> to vector<8x16xf32>
    %528 = vector.extract_strided_slice %300 {offsets = [8, 2], sizes = [8, 16], strides = [1, 1]} : vector<24x20xf32> to vector<8x16xf32>
    %529 = vector.extract_strided_slice %285 {offsets = [0, 2], sizes = [8, 16], strides = [1, 1]} : vector<8x20xf32> to vector<8x16xf32>
    %530 = arith.mulf %524, %527 : vector<8x16xf32>
    %531 = arith.mulf %525, %528 : vector<8x16xf32>
    %532 = arith.addf %530, %531 : vector<8x16xf32>
    %533 = arith.mulf %526, %529 : vector<8x16xf32>
    %534 = arith.addf %532, %533 : vector<8x16xf32>
    %cst_36 = arith.constant 0.000000e+00 : f32
    %535 = vector.broadcast %cst_36 : f32 to vector<8x16xf32>
    %536 = arith.cmpf ogt, %534, %535 : vector<8x16xf32>
    %cst_37 = arith.constant -1.000000e+00 : f32
    %cst_38 = arith.constant 1.000000e+00 : f32
    %537 = vector.broadcast %cst_37 : f32 to vector<8x16xf32>
    %538 = vector.broadcast %cst_38 : f32 to vector<8x16xf32>
    %539 = arith.select %536, %537, %538 : vector<8x16xi1>, vector<8x16xf32>
    %540 = arith.mulf %524, %539 : vector<8x16xf32>
    %541 = arith.mulf %525, %539 : vector<8x16xf32>
    %542 = arith.mulf %526, %539 : vector<8x16xf32>
    %cst_39 = arith.constant 0.000000e+00 : f32
    %543 = vector.broadcast %cst_39 : f32 to vector<8x16xf32>
    %544 = arith.cmpf ogt, %529, %543 : vector<8x16xf32>
    %cst_40 = arith.constant 0.000000e+00 : f32
    %545 = vector.broadcast %cst_40 : f32 to vector<8x16xf32>
    %546 = arith.select %544, %540, %545 : vector<8x16xi1>, vector<8x16xf32>
    %547 = arith.select %544, %541, %545 : vector<8x16xi1>, vector<8x16xf32>
    %548 = arith.select %544, %542, %545 : vector<8x16xi1>, vector<8x16xf32>
    %549 = arith.subf %546, %281 : vector<8x16xf32>
    %550 = math.absf %549 : vector<8x16xf32>
    %551 = arith.subf %547, %282 : vector<8x16xf32>
    %552 = math.absf %551 : vector<8x16xf32>
    %553 = arith.addf %550, %552 : vector<8x16xf32>
    %554 = arith.subf %548, %283 : vector<8x16xf32>
    %555 = math.absf %554 : vector<8x16xf32>
    %556 = arith.addf %553, %555 : vector<8x16xf32>
    %557 = vector.shape_cast %556 : vector<8x16xf32> to vector<1x8x16xf32>
    %cst_41 = arith.constant dense<0.000000e+00> : vector<1xf32>
    %558 = vector.multi_reduction <add>, %557, %cst_41 [1, 2] : vector<1x8x16xf32> to vector<1xf32>
    %559 = vector.shape_cast %558 : vector<1xf32> to vector<1x1x1xf32>
    %560 = vector.extract %559[0, 0, 0] : f32 from vector<1x1x1xf32>
    %561 = vector.broadcast %560 : f32 to vector<8x128xf32>
    %c0_42 = arith.constant 0 : index
    %c0_43 = arith.constant 0 : index
    %c0_44 = arith.constant 0 : index
    %c0_45 = arith.constant 0 : index
    %562 = vector.load %arg8[%c0_42, %c0_43, %c0_44, %c0_45] : memref<1x1x8x128xf32, #tpu.memory_space<vmem>>, vector<1x1x8x128xf32>
    %563 = vector.shape_cast %562 : vector<1x1x8x128xf32> to vector<8x128xf32>
    %564 = vector.shape_cast %561 : vector<8x128xf32> to vector<1x1x8x128xf32>
    tpu.vector_store %arg8[%c0_42, %c0_43, %c0_44, %c0_45], %564 {strides = array<i32>} : memref<1x1x8x128xf32, #tpu.memory_space<vmem>>, vector<1x1x8x128xf32>,
    return
  }
  func.func @transform_0(%arg0: i32, %arg1: i32) -> (i32, i32, i32) {
    %c1_i32 = arith.constant 1 : i32
    %0 = arith.subi %arg1, %c1_i32 : i32
    %c0_i32 = arith.constant 0 : i32
    %1 = arith.maxsi %0, %c0_i32 : i32
    %c0_i32_0 = arith.constant 0 : i32
    %c0_i32_1 = arith.constant 0 : i32
    return %arg0, %1, %c0_i32_0 : i32, i32, i32
  }
  func.func @transform_1(%arg0: i32, %arg1: i32) -> (i32, i32, i32) {
    %c0_i32 = arith.constant 0 : i32
    %c0_i32_0 = arith.constant 0 : i32
    return %arg0, %arg1, %c0_i32 : i32, i32, i32
  }
  func.func @transform_2(%arg0: i32, %arg1: i32) -> (i32, i32, i32) {
    %c1_i32 = arith.constant 1 : i32
    %0 = arith.addi %arg1, %c1_i32 : i32
    %c1_i32_0 = arith.constant 1 : i32
    %1 = arith.minsi %0, %c1_i32_0 : i32
    %c0_i32 = arith.constant 0 : i32
    %c0_i32_1 = arith.constant 0 : i32
    return %arg0, %1, %c0_i32 : i32, i32, i32
  }
  func.func @transform_3(%arg0: i32, %arg1: i32) -> (i32, i32, i32) {
    %c1_i32 = arith.constant 1 : i32
    %0 = arith.subi %arg1, %c1_i32 : i32
    %c0_i32 = arith.constant 0 : i32
    %1 = arith.maxsi %0, %c0_i32 : i32
    %c0_i32_0 = arith.constant 0 : i32
    %c0_i32_1 = arith.constant 0 : i32
    return %arg0, %1, %c0_i32_0 : i32, i32, i32
  }
  func.func @transform_4(%arg0: i32, %arg1: i32) -> (i32, i32, i32) {
    %c0_i32 = arith.constant 0 : i32
    %c0_i32_0 = arith.constant 0 : i32
    return %arg0, %arg1, %c0_i32 : i32, i32, i32
  }
  func.func @transform_5(%arg0: i32, %arg1: i32) -> (i32, i32, i32) {
    %c1_i32 = arith.constant 1 : i32
    %0 = arith.addi %arg1, %c1_i32 : i32
    %c1_i32_0 = arith.constant 1 : i32
    %1 = arith.minsi %0, %c1_i32_0 : i32
    %c0_i32 = arith.constant 0 : i32
    %c0_i32_1 = arith.constant 0 : i32
    return %arg0, %1, %c0_i32 : i32, i32, i32
  }
  func.func @transform_6(%arg0: i32, %arg1: i32) -> (i32, i32, i32, i32) {
    %c0_i32 = arith.constant 0 : i32
    %c0_i32_0 = arith.constant 0 : i32
    %c0_i32_1 = arith.constant 0 : i32
    return %arg0, %arg1, %c0_i32, %c0_i32_0 : i32, i32, i32, i32
  }
}

</mosaic_0001>

<llo_original>
// kernel: tpu_custom_call.1
$region0: #{tpu_custom_call.1}
  #allocation0 [shape = 'u32[]', space=smem, size = 0x4, offset = 0x4, fixed_abs, tag = 'smem constant byte address 0x4 - core index']
  #allocation1 [shape = 'u32[144,128]{1,0:T(1,128)}', space=vmem, size = 0x12000, scoped, tag = 'internal scratch']
  %s0 = inlined_call_operand.hbm [shape: f32[2,16,20], index: 0, kind: input, shape index: {}]
  %s1 = inlined_call_operand.hbm [shape: f32[2,16,20], index: 1, kind: input, shape index: {}]
  %s2 = inlined_call_operand.hbm [shape: f32[2,16,20], index: 2, kind: input, shape index: {}]
  %s3 = inlined_call_operand.hbm [shape: f32[2,16,20], index: 3, kind: input, shape index: {}]
  %s4 = inlined_call_operand.hbm [shape: f32[2,16,20], index: 4, kind: input, shape index: {}]
  %s5 = inlined_call_operand.hbm [shape: f32[2,16,20], index: 5, kind: input, shape index: {}]
  %s6 = inlined_call_operand.hbm [shape: f32[2,2,8,128], index: 6, kind: output, shape index: {}]
  %s7 = sld [smem:[#allocation0]]
  $region81: #{tpu_custom_call.1} parent=0
    _
  %s9 = ssub.s32 1, %s7
  %s10 = scalar_select 0, %s9, %s7
  $region1: #{tpu_custom_call.1} parent=0
    #allocation2 [shape = 'u8[8192]{0}', space=vmem, size = 0x2000, scoped, tag = 'input window, operand 0']
    #allocation3 [shape = 's32[2]{0}', space=sflag, size = 0x8, scoped, tag = 'scoped memory for tpu_custom_call.1']
    #allocation4 [shape = 's32[2]{0}', space=sflag, size = 0x8, scoped, tag = 'scoped memory for tpu_custom_call.1']
    #allocation5 [shape = 'u8[8192]{0}', space=vmem, size = 0x2000, scoped, tag = 'input window, operand 1']
    #allocation6 [shape = 's32[2]{0}', space=sflag, size = 0x8, scoped, tag = 'scoped memory for tpu_custom_call.1']
    #allocation7 [shape = 'u8[8192]{0}', space=vmem, size = 0x2000, scoped, tag = 'input window, operand 2']
    #allocation8 [shape = 'u8[8192]{0}', space=vmem, size = 0x2000, scoped, tag = 'input window, operand 3']
    #allocation9 [shape = 's32[2]{0}', space=sflag, size = 0x8, scoped, tag = 'scoped memory for tpu_custom_call.1']
    #allocation10 [shape = 'u8[8192]{0}', space=vmem, size = 0x2000, scoped, tag = 'input window, operand 4']
    #allocation11 [shape = 'u8[8192]{0}', space=vmem, size = 0x2000, scoped, tag = 'input window, operand 5']
    #allocation12 [shape = 's32[2]{0}', space=sflag, size = 0x8, scoped, tag = 'scoped memory for tpu_custom_call.1']
    #allocation13 [shape = 'u8[8192]{0}', space=vmem, size = 0x2000, scoped, tag = 'output window, operand 0']
    %11 = vsyncpa [#allocation3], 0
    %s12 = scalar_lea.sflag [#allocation3], 1
    %13 = vsyncpa %s12, 0
    %14 = vsyncpa [#allocation6], 0
    %s15 = scalar_lea.sflag [#allocation6], 1
    %16 = vsyncpa %s15, 0
    %17 = vsyncpa [#allocation9], 0
    %s18 = scalar_lea.sflag [#allocation9], 1
    %19 = vsyncpa %s18, 0
    %20 = vsyncpa [#allocation12], 0
    %s21 = scalar_lea.sflag [#allocation12], 1
    %22 = vsyncpa %s21, 0
    %23 = vsyncpa [#allocation4], 0
    %s24 = scalar_lea.sflag [#allocation4], 1
    %25 = vsyncpa %s24, 0
    loop: start=0, step=1, limit=6
    $region2: #{tpu_custom_call.1} parent=1 // loop_pre_header
      _
    $region3: #{tpu_custom_call.1} parent=1 // loop_header
      %s27 = sphi 0, %s31
      %p28 = scmp.ge.s32.totalorder %s27, 6
      %s34 = sphi 0, %s46
      %s35 = sphi 0, %s42
      %s36 = sphi 0, %s34
      %s37 = sphi 0, %s35
      %s38 = sphi 0, %s36
      %s39 = sphi 0, %s37
      %s57 = sphi 0, %s59
      %s60 = sphi 0, %s57
      %s61 = sphi 0, %s60
      %s77 = sphi 0, %s61
      %s85 = sphi 0, %s87
      %s88 = sphi 0, %s85
      %s89 = sphi 0, %s88
      %s105 = sphi 0, %s89
      %s119 = sphi 0, %s121
      %s122 = sphi 0, %s119
      %s123 = sphi 0, %s122
      %s139 = sphi 0, %s123
      %s153 = sphi 0, %s155
      %s156 = sphi 0, %s153
      %s157 = sphi 0, %s156
      %s173 = sphi 0, %s157
      %s181 = sphi 0, %s183
      %s184 = sphi 0, %s181
      %s185 = sphi 0, %s184
      %s201 = sphi 0, %s185
      %s215 = sphi 0, %s217
      %s218 = sphi 0, %s215
      %s219 = sphi 0, %s218
      %s235 = sphi 0, %s219
      %s243 = sphi 0, %s245
      %s246 = sphi 0, %s243
      %s247 = sphi 0, %s246
      %s263 = sphi 0, %s247
    $region4: #{tpu_custom_call.1} parent=1 // loop_header_branch
      %30 = sbr.rel (%p28) target = $region8
    $region5: #{tpu_custom_call.1} parent=1 // loop_body
      %s32 = ssub.s32 %s27, 1
      %s33 = ssub.s32 %s27, 2
      %s40 = sadd.s32 1, %s35
      %p41 = scmp.ge.s32.totalorder %s40, 2
      %s42 = scalar_select %p41, 0, %s40
      %s43 = sadd.s32 1, %s34
      %s44 = scalar_select %p41, %s43, %s34
      %p45 = scmp.ge.s32.totalorder %s44, 2
      %s46 = scalar_select %p45, 0, %s44
      %s47 = ssub.s32 %s35, 1
      %p48 = scmp.gt.s32.totalorder %s47, 0
      %s49 = scalar_select %p48, %s47, 0
      %s50 = ssub.s32 %s42, 1
      %p51 = scmp.gt.s32.totalorder %s50, 0
      %s52 = scalar_select %p51, %s50, 0
      %s53 = ssub.s32 %s34, %s46
      %s54 = ssub.s32 %s49, %s52
      %s55 = sor.u32 %s53, %s54
      %p56 = scmp.eq.s32.totalorder %s55, 0
      %s58 = sadd.s32 %s57, 1
      %s59 = scalar_select %p56, %s57, %s58
      %p62 = pneg %p56
      %p63 = scmp.eq.s32.totalorder %s27, 3
      %p64 = por %p62, %p63
      %p65 = scmp.ne.s32.totalorder %s57, %s60
      %p66 = scmp.eq.s32.totalorder %s27, 0
      %p67 = por %p65, %p66
      %p68 = scmp.ne.s32.totalorder %s57, %s60
      %p69 = scmp.eq.s32.totalorder %s32, 3
      %p70 = por %p68, %p69
      %p71 = scmp.ne.s32.totalorder %s60, %s61
      %p72 = scmp.eq.s32.totalorder %s32, 0
      %p73 = por %p71, %p72
      %p74 = scmp.ne.s32.totalorder %s60, %s61
      %p75 = scmp.eq.s32.totalorder %s33, 3
      %p76 = por %p74, %p75
      %p78 = scmp.ne.s32.totalorder %s61, %s77
      %p79 = scmp.eq.s32.totalorder %s33, 0
      %p80 = por %p78, %p79
      %s81 = ssub.s32 %s34, %s46
      %s82 = ssub.s32 %s35, %s42
      %s83 = sor.u32 %s81, %s82
      %p84 = scmp.eq.s32.totalorder %s83, 0
      %s86 = sadd.s32 %s85, 1
      %s87 = scalar_select %p84, %s85, %s86
      %p90 = pneg %p84
      %p91 = scmp.eq.s32.totalorder %s27, 3
      %p92 = por %p90, %p91
      %p93 = scmp.ne.s32.totalorder %s85, %s88
      %p94 = scmp.eq.s32.totalorder %s27, 0
      %p95 = por %p93, %p94
      %p96 = scmp.ne.s32.totalorder %s85, %s88
      %p97 = scmp.eq.s32.totalorder %s32, 3
      %p98 = por %p96, %p97
      %p99 = scmp.ne.s32.totalorder %s88, %s89
      %p100 = scmp.eq.s32.totalorder %s32, 0
      %p101 = por %p99, %p100
      %p102 = scmp.ne.s32.totalorder %s88, %s89
      %p103 = scmp.eq.s32.totalorder %s33, 3
      %p104 = por %p102, %p103
      %p106 = scmp.ne.s32.totalorder %s89, %s105
      %p107 = scmp.eq.s32.totalorder %s33, 0
      %p108 = por %p106, %p107
      %s109 = sadd.s32 %s35, 1
      %p110 = scmp.lt.s32.totalorder %s109, 1
      %s111 = scalar_select %p110, %s109, 1
      %s112 = sadd.s32 %s42, 1
      %p113 = scmp.lt.s32.totalorder %s112, 1
      %s114 = scalar_select %p113, %s112, 1
      %s115 = ssub.s32 %s34, %s46
      %s116 = ssub.s32 %s111, %s114
      %s117 = sor.u32 %s115, %s116
      %p118 = scmp.eq.s32.totalorder %s117, 0
      %s120 = sadd.s32 %s119, 1
      %s121 = scalar_select %p118, %s119, %s120
      %p124 = pneg %p118
      %p125 = scmp.eq.s32.totalorder %s27, 3
      %p126 = por %p124, %p125
      %p127 = scmp.ne.s32.totalorder %s119, %s122
      %p128 = scmp.eq.s32.totalorder %s27, 0
      %p129 = por %p127, %p128
      %p130 = scmp.ne.s32.totalorder %s119, %s122
      %p131 = scmp.eq.s32.totalorder %s32, 3
      %p132 = por %p130, %p131
      %p133 = scmp.ne.s32.totalorder %s122, %s123
      %p134 = scmp.eq.s32.totalorder %s32, 0
      %p135 = por %p133, %p134
      %p136 = scmp.ne.s32.totalorder %s122, %s123
      %p137 = scmp.eq.s32.totalorder %s33, 3
      %p138 = por %p136, %p137
      %p140 = scmp.ne.s32.totalorder %s123, %s139
      %p141 = scmp.eq.s32.totalorder %s33, 0
      %p142 = por %p140, %p141
      %s143 = ssub.s32 %s35, 1
      %p144 = scmp.gt.s32.totalorder %s143, 0
      %s145 = scalar_select %p144, %s143, 0
      %s146 = ssub.s32 %s42, 1
      %p147 = scmp.gt.s32.totalorder %s146, 0
      %s148 = scalar_select %p147, %s146, 0
      %s149 = ssub.s32 %s34, %s46
      %s150 = ssub.s32 %s145, %s148
      %s151 = sor.u32 %s149, %s150
      %p152 = scmp.eq.s32.totalorder %s151, 0
      %s154 = sadd.s32 %s153, 1
      %s155 = scalar_select %p152, %s153, %s154
      %p158 = pneg %p152
      %p159 = scmp.eq.s32.totalorder %s27, 3
      %p160 = por %p158, %p159
      %p161 = scmp.ne.s32.totalorder %s153, %s156
      %p162 = scmp.eq.s32.totalorder %s27, 0
      %p163 = por %p161, %p162
      %p164 = scmp.ne.s32.totalorder %s153, %s156
      %p165 = scmp.eq.s32.totalorder %s32, 3
      %p166 = por %p164, %p165
      %p167 = scmp.ne.s32.totalorder %s156, %s157
      %p168 = scmp.eq.s32.totalorder %s32, 0
      %p169 = por %p167, %p168
      %p170 = scmp.ne.s32.totalorder %s156, %s157
      %p171 = scmp.eq.s32.totalorder %s33, 3
      %p172 = por %p170, %p171
      %p174 = scmp.ne.s32.totalorder %s157, %s173
      %p175 = scmp.eq.s32.totalorder %s33, 0
      %p176 = por %p174, %p175
      %s177 = ssub.s32 %s34, %s46
      %s178 = ssub.s32 %s35, %s42
      %s179 = sor.u32 %s177, %s178
      %p180 = scmp.eq.s32.totalorder %s179, 0
      %s182 = sadd.s32 %s181, 1
      %s183 = scalar_select %p180, %s181, %s182
      %p186 = pneg %p180
      %p187 = scmp.eq.s32.totalorder %s27, 3
      %p188 = por %p186, %p187
      %p189 = scmp.ne.s32.totalorder %s181, %s184
      %p190 = scmp.eq.s32.totalorder %s27, 0
      %p191 = por %p189, %p190
      %p192 = scmp.ne.s32.totalorder %s181, %s184
      %p193 = scmp.eq.s32.totalorder %s32, 3
      %p194 = por %p192, %p193
      %p195 = scmp.ne.s32.totalorder %s184, %s185
      %p196 = scmp.eq.s32.totalorder %s32, 0
      %p197 = por %p195, %p196
      %p198 = scmp.ne.s32.totalorder %s184, %s185
      %p199 = scmp.eq.s32.totalorder %s33, 3
      %p200 = por %p198, %p199
      %p202 = scmp.ne.s32.totalorder %s185, %s201
      %p203 = scmp.eq.s32.totalorder %s33, 0
      %p204 = por %p202, %p203
      %s205 = sadd.s32 %s35, 1
      %p206 = scmp.lt.s32.totalorder %s205, 1
      %s207 = scalar_select %p206, %s205, 1
      %s208 = sadd.s32 %s42, 1
      %p209 = scmp.lt.s32.totalorder %s208, 1
      %s210 = scalar_select %p209, %s208, 1
      %s211 = ssub.s32 %s34, %s46
      %s212 = ssub.s32 %s207, %s210
      %s213 = sor.u32 %s211, %s212
      %p214 = scmp.eq.s32.totalorder %s213, 0
      %s216 = sadd.s32 %s215, 1
      %s217 = scalar_select %p214, %s215, %s216
      %p220 = pneg %p214
      %p221 = scmp.eq.s32.totalorder %s27, 3
      %p222 = por %p220, %p221
      %p223 = scmp.ne.s32.totalorder %s215, %s218
      %p224 = scmp.eq.s32.totalorder %s27, 0
      %p225 = por %p223, %p224
      %p226 = scmp.ne.s32.totalorder %s215, %s218
      %p227 = scmp.eq.s32.totalorder %s32, 3
      %p228 = por %p226, %p227
      %p229 = scmp.ne.s32.totalorder %s218, %s219
      %p230 = scmp.eq.s32.totalorder %s32, 0
      %p231 = por %p229, %p230
      %p232 = scmp.ne.s32.totalorder %s218, %s219
      %p233 = scmp.eq.s32.totalorder %s33, 3
      %p234 = por %p232, %p233
      %p236 = scmp.ne.s32.totalorder %s219, %s235
      %p237 = scmp.eq.s32.totalorder %s33, 0
      %p238 = por %p236, %p237
      %s239 = ssub.s32 %s34, %s46
      %s240 = ssub.s32 %s35, %s42
      %s241 = sor.u32 %s239, %s240
      %p242 = scmp.eq.s32.totalorder %s241, 0
      %s244 = sadd.s32 %s243, 1
      %s245 = scalar_select %p242, %s243, %s244
      %p248 = pneg %p242
      %p249 = scmp.eq.s32.totalorder %s27, 3
      %p250 = por %p248, %p249
      %p251 = scmp.ne.s32.totalorder %s243, %s246
      %p252 = scmp.eq.s32.totalorder %s27, 0
      %p253 = por %p251, %p252
      %p254 = scmp.ne.s32.totalorder %s243, %s246
      %p255 = scmp.eq.s32.totalorder %s32, 3
      %p256 = por %p254, %p255
      %p257 = scmp.ne.s32.totalorder %s246, %s247
      %p258 = scmp.eq.s32.totalorder %s32, 0
      %p259 = por %p257, %p258
      %p260 = scmp.ne.s32.totalorder %s246, %s247
      %p261 = scmp.eq.s32.totalorder %s33, 3
      %p262 = por %p260, %p261
      %p264 = scmp.ne.s32.totalorder %s247, %s263
      %p265 = scmp.eq.s32.totalorder %s33, 0
      %p266 = por %p264, %p265
      %p267 = scmp.le.s32.totalorder 1, %s27
      %p268 = scmp.lt.s32.totalorder %s27, 5
      %p269 = pnand %p267, %p268
      %p270 = pneg %p269
      // Predicated region
      $region9: #{tpu_custom_call.1} parent=5 // pred_check
        _
      $region10: #{tpu_custom_call.1} parent=5 // pred_check_branch
        %272 = sbr.rel (%p269) target = $region12
      $region11: #{tpu_custom_call.1} parent=5 // pred_region
        %s273 = ssub.s32 %s27, 1
      $region12: #{tpu_custom_call.1} parent=5 // pred_fallthru
        _
      %p274 = scmp.lt.s32.totalorder %s27, 4
      // Predicated region
      $region13: #{tpu_custom_call.1} parent=5 // pred_check
        %p275 = pneg %p274
      $region14: #{tpu_custom_call.1} parent=5 // pred_check_branch
        %277 = sbr.rel (%p275) target = $region16
      $region15: #{tpu_custom_call.1} parent=5 // pred_region
        // Predicated region
        $region17: #{tpu_custom_call.1} parent=15 // pred_check
          %p278 = pneg %p67
        $region18: #{tpu_custom_call.1} parent=15 // pred_check_branch
          %280 = sbr.rel (%p278) target = $region20
        $region19: #{tpu_custom_call.1} parent=15 // pred_region
          %s281 = sand.u32 %s57, 1
          %s282 = scalar_lea.sflag [#allocation3], %s281
          %s283 = sand.u32 %s57, 1
          %s284 = smul.addr %s283, 8
          %s285 = scalar_lea.vmem [#allocation2], %s284
          %s286 = ssub.s32 %s35, 1
          %p287 = scmp.gt.s32.totalorder %s286, 0
          %s288 = scalar_select %p287, %s286, 0
          %s290 = ssub.s32 128, 128
          %291 = vsyncadd %s282, %s290
          %s292 = smul.addr %s34, 2
          %s293 = sadd.s32 %s288, %s292
          %s294 = smul.addr %s293, 128
          %s295 = scalar_lea.hbm %s0, %s294
          %s297 = sshll.u32 %s285, 4
          %s298 = int_to_ptr.vmem [resolvable:$true] %s297
          %300 = dma.hbm_to_vmem [thread:$0]  %s295, 128, %s298, %s282
        $region20: #{tpu_custom_call.1} parent=15 // pred_fallthru
          _
        // Predicated region
        $region21: #{tpu_custom_call.1} parent=15 // pred_check
          %p301 = pneg %p95
        $region22: #{tpu_custom_call.1} parent=15 // pred_check_branch
          %303 = sbr.rel (%p301) target = $region24
        $region23: #{tpu_custom_call.1} parent=15 // pred_region
          %s304 = sand.u32 %s27, 1
          %s305 = scalar_lea.sflag [#allocation6], %s304
          %s306 = sand.u32 %s85, 1
          %s307 = smul.addr %s306, 8
          %s308 = scalar_lea.vmem [#allocation5], %s307
          %s310 = ssub.s32 128, 128
          %311 = vsyncadd %s305, %s310
          %s312 = smul.addr %s34, 2
          %s313 = sadd.s32 %s35, %s312
          %s314 = smul.addr %s313, 128
          %s315 = scalar_lea.hbm %s1, %s314
          %s317 = sshll.u32 %s308, 4
          %s318 = int_to_ptr.vmem [resolvable:$true] %s317
          %320 = dma.hbm_to_vmem [thread:$0]  %s315, 128, %s318, %s305
        $region24: #{tpu_custom_call.1} parent=15 // pred_fallthru
          _
        // Predicated region
        $region25: #{tpu_custom_call.1} parent=15 // pred_check
          %p321 = pneg %p129
        $region26: #{tpu_custom_call.1} parent=15 // pred_check_branch
          %323 = sbr.rel (%p321) target = $region28
        $region27: #{tpu_custom_call.1} parent=15 // pred_region
          %s324 = sand.u32 %s27, 1
          %s325 = scalar_lea.sflag [#allocation6], %s324
          %s326 = sand.u32 %s119, 1
          %s327 = smul.addr %s326, 8
          %s328 = scalar_lea.vmem [#allocation7], %s327
          %s329 = sadd.s32 %s35, 1
          %p330 = scmp.lt.s32.totalorder %s329, 1
          %s331 = scalar_select %p330, %s329, 1
          %s333 = ssub.s32 128, 128
          %334 = vsyncadd %s325, %s333
          %s335 = smul.addr %s34, 2
          %s336 = sadd.s32 %s331, %s335
          %s337 = smul.addr %s336, 128
          %s338 = scalar_lea.hbm %s2, %s337
          %s340 = sshll.u32 %s328, 4
          %s341 = int_to_ptr.vmem [resolvable:$true] %s340
          %343 = dma.hbm_to_vmem [thread:$0]  %s338, 128, %s341, %s325
        $region28: #{tpu_custom_call.1} parent=15 // pred_fallthru
          _
        // Predicated region
        $region29: #{tpu_custom_call.1} parent=15 // pred_check
          %p344 = pneg %p163
        $region30: #{tpu_custom_call.1} parent=15 // pred_check_branch
          %346 = sbr.rel (%p344) target = $region32
        $region31: #{tpu_custom_call.1} parent=15 // pred_region
          %s347 = sand.u32 %s27, 1
          %s348 = scalar_lea.sflag [#allocation9], %s347
          %s349 = sand.u32 %s153, 1
          %s350 = smul.addr %s349, 8
          %s351 = scalar_lea.vmem [#allocation8], %s350
          %s352 = ssub.s32 %s35, 1
          %p353 = scmp.gt.s32.totalorder %s352, 0
          %s354 = scalar_select %p353, %s352, 0
          %s356 = ssub.s32 128, 128
          %357 = vsyncadd %s348, %s356
          %s358 = smul.addr %s34, 2
          %s359 = sadd.s32 %s354, %s358
          %s360 = smul.addr %s359, 128
          %s361 = scalar_lea.hbm %s3, %s360
          %s363 = sshll.u32 %s351, 4
          %s364 = int_to_ptr.vmem [resolvable:$true] %s363
          %366 = dma.hbm_to_vmem [thread:$0]  %s361, 128, %s364, %s348
        $region32: #{tpu_custom_call.1} parent=15 // pred_fallthru
          _
        // Predicated region
        $region33: #{tpu_custom_call.1} parent=15 // pred_check
          %p367 = pneg %p191
        $region34: #{tpu_custom_call.1} parent=15 // pred_check_branch
          %369 = sbr.rel (%p367) target = $region36
        $region35: #{tpu_custom_call.1} parent=15 // pred_region
          %s370 = sand.u32 %s27, 1
          %s371 = scalar_lea.sflag [#allocation9], %s370
          %s372 = sand.u32 %s181, 1
          %s373 = smul.addr %s372, 8
          %s374 = scalar_lea.vmem [#allocation10], %s373
          %s376 = ssub.s32 128, 128
          %377 = vsyncadd %s371, %s376
          %s378 = smul.addr %s34, 2
          %s379 = sadd.s32 %s35, %s378
          %s380 = smul.addr %s379, 128
          %s381 = scalar_lea.hbm %s4, %s380
          %s383 = sshll.u32 %s374, 4
          %s384 = int_to_ptr.vmem [resolvable:$true] %s383
          %386 = dma.hbm_to_vmem [thread:$0]  %s381, 128, %s384, %s371
        $region36: #{tpu_custom_call.1} parent=15 // pred_fallthru
          _
        // Predicated region
        $region37: #{tpu_custom_call.1} parent=15 // pred_check
          %p387 = pneg %p225
        $region38: #{tpu_custom_call.1} parent=15 // pred_check_branch
          %389 = sbr.rel (%p387) target = $region40
        $region39: #{tpu_custom_call.1} parent=15 // pred_region
          %s390 = sand.u32 %s215, 1
          %s391 = scalar_lea.sflag [#allocation12], %s390
          %s392 = sand.u32 %s215, 1
          %s393 = smul.addr %s392, 8
          %s394 = scalar_lea.vmem [#allocation11], %s393
          %s395 = sadd.s32 %s35, 1
          %p396 = scmp.lt.s32.totalorder %s395, 1
          %s397 = scalar_select %p396, %s395, 1
          %s399 = ssub.s32 128, 128
          %400 = vsyncadd %s391, %s399
          %s401 = smul.addr %s34, 2
          %s402 = sadd.s32 %s397, %s401
          %s403 = smul.addr %s402, 128
          %s404 = scalar_lea.hbm %s5, %s403
          %s406 = sshll.u32 %s394, 4
          %s407 = int_to_ptr.vmem [resolvable:$true] %s406
          %409 = dma.hbm_to_vmem [thread:$0]  %s404, 128, %s407, %s391
        $region40: #{tpu_custom_call.1} parent=15 // pred_fallthru
          _
      $region16: #{tpu_custom_call.1} parent=5 // pred_fallthru
        _
      %p410 = scmp.le.s32.totalorder 1, %s27
      %p411 = scmp.lt.s32.totalorder %s27, 5
      %p412 = pnand %p410, %p411
      %p413 = pneg %p412
      // Predicated region
      $region41: #{tpu_custom_call.1} parent=5 // pred_check
        _
      $region42: #{tpu_custom_call.1} parent=5 // pred_check_branch
        %415 = sbr.rel (%p412) target = $region44
      $region43: #{tpu_custom_call.1} parent=5 // pred_region
        %s416 = ssub.s32 %s27, 1
        %s417 = sand.u32 %s60, 1
        %s418 = scalar_lea.sflag [#allocation3], %s417
        %s419 = sand.u32 %s60, 1
        %s420 = smul.addr %s419, 8
        %s421 = scalar_lea.vmem [#allocation2], %s420
        // Predicated region
        $region45: #{tpu_custom_call.1} parent=43 // pred_check
          %p422 = pneg %p73
        $region46: #{tpu_custom_call.1} parent=43 // pred_check_branch
          %424 = sbr.rel (%p422) target = $region48
        $region47: #{tpu_custom_call.1} parent=43 // pred_region
          %425 = dma.done %s418, 128
        $region48: #{tpu_custom_call.1} parent=43 // pred_fallthru
          _
        %s426 = sand.u32 %s32, 1
        %s427 = scalar_lea.sflag [#allocation6], %s426
        %s428 = sand.u32 %s88, 1
        %s429 = smul.addr %s428, 8
        %s430 = scalar_lea.vmem [#allocation5], %s429
        // Predicated region
        $region49: #{tpu_custom_call.1} parent=43 // pred_check
          %p431 = pneg %p101
        $region50: #{tpu_custom_call.1} parent=43 // pred_check_branch
          %433 = sbr.rel (%p431) target = $region52
        $region51: #{tpu_custom_call.1} parent=43 // pred_region
          %434 = dma.done %s427, 128
        $region52: #{tpu_custom_call.1} parent=43 // pred_fallthru
          _
        %s435 = sand.u32 %s32, 1
        %s436 = scalar_lea.sflag [#allocation6], %s435
        %s437 = sand.u32 %s122, 1
        %s438 = smul.addr %s437, 8
        %s439 = scalar_lea.vmem [#allocation7], %s438
        // Predicated region
        $region53: #{tpu_custom_call.1} parent=43 // pred_check
          %p440 = pneg %p135
        $region54: #{tpu_custom_call.1} parent=43 // pred_check_branch
          %442 = sbr.rel (%p440) target = $region56
        $region55: #{tpu_custom_call.1} parent=43 // pred_region
          %443 = dma.done %s436, 128
        $region56: #{tpu_custom_call.1} parent=43 // pred_fallthru
          _
        %s444 = sand.u32 %s32, 1
        %s445 = scalar_lea.sflag [#allocation9], %s444
        %s446 = sand.u32 %s156, 1
        %s447 = smul.addr %s446, 8
        %s448 = scalar_lea.vmem [#allocation8], %s447
        // Predicated region
        $region57: #{tpu_custom_call.1} parent=43 // pred_check
          %p449 = pneg %p169
        $region58: #{tpu_custom_call.1} parent=43 // pred_check_branch
          %451 = sbr.rel (%p449) target = $region60
        $region59: #{tpu_custom_call.1} parent=43 // pred_region
          %452 = dma.done %s445, 128
        $region60: #{tpu_custom_call.1} parent=43 // pred_fallthru
          _
        %s453 = sand.u32 %s32, 1
        %s454 = scalar_lea.sflag [#allocation9], %s453
        %s455 = sand.u32 %s184, 1
        %s456 = smul.addr %s455, 8
        %s457 = scalar_lea.vmem [#allocation10], %s456
        // Predicated region
        $region61: #{tpu_custom_call.1} parent=43 // pred_check
          %p458 = pneg %p197
        $region62: #{tpu_custom_call.1} parent=43 // pred_check_branch
          %460 = sbr.rel (%p458) target = $region64
        $region63: #{tpu_custom_call.1} parent=43 // pred_region
          %461 = dma.done %s454, 128
        $region64: #{tpu_custom_call.1} parent=43 // pred_fallthru
          _
        %s462 = sand.u32 %s218, 1
        %s463 = scalar_lea.sflag [#allocation12], %s462
        %s464 = sand.u32 %s218, 1
        %s465 = smul.addr %s464, 8
        %s466 = scalar_lea.vmem [#allocation11], %s465
        // Predicated region
        $region65: #{tpu_custom_call.1} parent=43 // pred_check
          %p467 = pneg %p231
        $region66: #{tpu_custom_call.1} parent=43 // pred_check_branch
          %469 = sbr.rel (%p467) target = $region68
        $region67: #{tpu_custom_call.1} parent=43 // pred_region
          %470 = dma.done %s463, 128
        $region68: #{tpu_custom_call.1} parent=43 // pred_fallthru
          _
        %s471 = sand.u32 %s60, 1
        %s472 = scalar_lea.sflag [#allocation3], %s471
        %s473 = sand.u32 %s60, 1
        %s474 = smul.addr %s473, 8
        %s475 = scalar_lea.vmem [#allocation2], %s474
        %p476 = pneg %p73
        %p477 = pneg %p70
        %s478 = sand.u32 %s32, 1
        %s479 = scalar_lea.sflag [#allocation6], %s478
        %s480 = sand.u32 %s88, 1
        %s481 = smul.addr %s480, 8
        %s482 = scalar_lea.vmem [#allocation5], %s481
        %p483 = pneg %p101
        %p484 = pneg %p98
        %s485 = sand.u32 %s32, 1
        %s486 = scalar_lea.sflag [#allocation6], %s485
        %s487 = sand.u32 %s122, 1
        %s488 = smul.addr %s487, 8
        %s489 = scalar_lea.vmem [#allocation7], %s488
        %p490 = pneg %p135
        %p491 = pneg %p132
        %s492 = sand.u32 %s32, 1
        %s493 = scalar_lea.sflag [#allocation9], %s492
        %s494 = sand.u32 %s156, 1
        %s495 = smul.addr %s494, 8
        %s496 = scalar_lea.vmem [#allocation8], %s495
        %p497 = pneg %p169
        %p498 = pneg %p166
        %s499 = sand.u32 %s32, 1
        %s500 = scalar_lea.sflag [#allocation9], %s499
        %s501 = sand.u32 %s184, 1
        %s502 = smul.addr %s501, 8
        %s503 = scalar_lea.vmem [#allocation10], %s502
        %p504 = pneg %p197
        %p505 = pneg %p194
        %s506 = sand.u32 %s218, 1
        %s507 = scalar_lea.sflag [#allocation12], %s506
        %s508 = sand.u32 %s218, 1
        %s509 = smul.addr %s508, 8
        %s510 = scalar_lea.vmem [#allocation11], %s509
        %p511 = pneg %p231
        %p512 = pneg %p228
        %p513 = pneg %p259
        %p514 = pneg %p256
        %s515 = sand.u32 %s246, 1
        %s516 = scalar_lea.sflag [#allocation4], %s515
        %s517 = sand.u32 %s246, 1
        %s518 = smul.addr %s517, 8
        %s519 = scalar_lea.vmem [#allocation13], %s518
        %s520 = ssub.s32 %s37, 1
        %p521 = scmp.gt.s32.totalorder %s520, 0
        %s522 = scalar_select %p521, %s520, 0
        %s523 = sadd.s32 %s37, 1
        %p524 = scmp.lt.s32.totalorder %s523, 1
        %s525 = scalar_select %p524, %s523, 1
        %s526 = ssub.s32 %s37, 1
        %p527 = scmp.gt.s32.totalorder %s526, 0
        %s528 = scalar_select %p527, %s526, 0
        %s529 = sadd.s32 %s37, 1
        %p530 = scmp.lt.s32.totalorder %s529, 1
        %s531 = scalar_select %p530, %s529, 1
        %p532 = scmp.gt.s32.totalorder %s37, 0
        %s533 = scalar_select %p532, 1, 0
        %s534 = scvt.s32.f32 %s533
        %p535 = scmp.lt.s32.totalorder %s37, 1
        %s536 = scalar_select %p535, 1, 0
        %s537 = scvt.s32.f32 %s536
        %v538 = vlaneseq
        %v539 = vshrl.u32 %v538, 7
        %v540 = vadd.s32 %v539, 8
        %v541 = vadd.s32 %v539, 16
        %v542 = vlaneseq
        %v543 = vand.u32 %v542, 127
        %s544 = smul.u32 %s37, 8
        %s545 = ssub.s32 %s544, 8
        %s546 = scvt.s32.f32 %s545
        %v547 = vcvt.s32.f32 %v539
        %v548 = vcvt.s32.f32 %v540
        %v549 = vcvt.s32.f32 %v541
        %v550 = vstv %s546
        %v551 = vadd.f32 %v547, %v550
        %v552 = vadd.f32 %v548, %v550
        %v553 = vadd.f32 %v549, %v550
        %v554 = vsub.f32 %v551, 8.0
        %v555 = vsub.f32 %v552, 8.0
        %v556 = vsub.f32 %v553, 8.0
        %v557 = vcvt.s32.f32 %v543
        %v558 = vsub.f32 %v557, 10.0
        %v559 = vld [vmem:[%s457] sm:$0xff]
        %v560 = vld [vmem:[%s448] sm:$0xff]
        %v561 = vstv %s534
        %v562 = vmul.f32 %v560, %v561
        %v563 = vld [vmem:[%s466] sm:$0xff]
        %v564 = vstv %s537
        %v565 = vmul.f32 %v563, %v564
        %v566 = vmul.f32 %v558, %v562
        %v567 = vmul.f32 %v558, %v559
        %v568 = vmul.f32 %v558, %v565
        %v569 = vmul.f32 %v566, 0.125
        %v570 = vmul.f32 %v567, 0.125
        %v571 = vmul.f32 %v568, 0.125
        %v572 = vmul.f32 %v554, %v562
        %v573 = vmul.f32 %v555, %v559
        %v574 = vmul.f32 %v556, %v565
        %v575 = vmul.f32 %v572, 0.125
        %v576 = vmul.f32 %v573, 0.125
        %v577 = vmul.f32 %v574, 0.125
        %v578 = vmul.f32 %v569, %v569
        %v579 = vmul.f32 %v570, %v570
        %v580 = vmul.f32 %v571, %v571
        %vm583 = vcmask 1046528
        %v584 = vrot.slane %v578, 1
        %v585 = vrot.slane %v579, 1
        %v586 = vsel %vm583, %v584, %v585
        %v589 = vadd.f32 %v578, %v586
        %v590 = vadd.f32 %v579, %v585
        %v591 = vrot.slane %v579, 2
        %v593 = vadd.f32 %v589, %v591
        %v594 = vadd.f32 %v590, %v591
        %vm596 = vcmask 1044480
        %v597 = vrot.slane %v579, 3
        %v598 = vrot.slane %v580, 3
        %v599 = vsel %vm596, %v597, %v598
        %v602 = vadd.f32 %v593, %v597
        %v603 = vadd.f32 %v594, %v599
        %vm604 = vcmask 1043456
        %v605 = vrot.slane %v579, 4
        %v606 = vrot.slane %v580, 4
        %v607 = vsel %vm604, %v605, %v606
        %v610 = vadd.f32 %v602, %v605
        %v611 = vadd.f32 %v603, %v607
        %614 = vrot.lane.b32.xlu0 %v610, 127
        %v615 = vpop.permute.xlu0 %614
        %616 = vrot.lane.b32.xlu0 %v611, 127
        %v617 = vpop.permute.xlu0 %616
        %v620 = vadd.f32 %v610, %v615
        %v621 = vadd.f32 %v611, %v617
        %622 = vrot.lane.b32.xlu0 %v610, 126
        %v623 = vpop.permute.xlu0 %622
        %624 = vrot.lane.b32.xlu0 %v611, 126
        %v625 = vpop.permute.xlu0 %624
        %v628 = vadd.f32 %v620, %v623
        %v629 = vadd.f32 %v621, %v625
        %630 = vrot.lane.b32.xlu0 %v610, 125
        %v631 = vpop.permute.xlu0 %630
        %632 = vrot.lane.b32.xlu0 %v611, 125
        %v633 = vpop.permute.xlu0 %632
        %v636 = vadd.f32 %v628, %v631
        %v637 = vadd.f32 %v629, %v633
        %638 = vrot.lane.b32.xlu0 %v610, 124
        %v639 = vpop.permute.xlu0 %638
        %640 = vrot.lane.b32.xlu0 %v611, 124
        %v641 = vpop.permute.xlu0 %640
        %v644 = vadd.f32 %v636, %v639
        %v645 = vadd.f32 %v637, %v641
        %v646 = vmul.f32 %v575, %v575
        %v647 = vmul.f32 %v576, %v576
        %v648 = vmul.f32 %v577, %v577
        %v651 = vrot.slane %v646, 1
        %v652 = vrot.slane %v647, 1
        %v653 = vsel %vm583, %v651, %v652
        %v656 = vadd.f32 %v646, %v653
        %v657 = vadd.f32 %v647, %v652
        %v658 = vrot.slane %v647, 2
        %v660 = vadd.f32 %v656, %v658
        %v661 = vadd.f32 %v657, %v658
        %v663 = vrot.slane %v647, 3
        %v664 = vrot.slane %v648, 3
        %v665 = vsel %vm596, %v663, %v664
        %v668 = vadd.f32 %v660, %v663
        %v669 = vadd.f32 %v661, %v665
        %v670 = vrot.slane %v647, 4
        %v671 = vrot.slane %v648, 4
        %v672 = vsel %vm604, %v670, %v671
        %v675 = vadd.f32 %v668, %v670
        %v676 = vadd.f32 %v669, %v672
        %679 = vrot.lane.b32.xlu0 %v675, 127
        %v680 = vpop.permute.xlu0 %679
        %681 = vrot.lane.b32.xlu0 %v676, 127
        %v682 = vpop.permute.xlu0 %681
        %v685 = vadd.f32 %v675, %v680
        %v686 = vadd.f32 %v676, %v682
        %687 = vrot.lane.b32.xlu0 %v675, 126
        %v688 = vpop.permute.xlu0 %687
        %689 = vrot.lane.b32.xlu0 %v676, 126
        %v690 = vpop.permute.xlu0 %689
        %v693 = vadd.f32 %v685, %v688
        %v694 = vadd.f32 %v686, %v690
        %695 = vrot.lane.b32.xlu0 %v675, 125
        %v696 = vpop.permute.xlu0 %695
        %697 = vrot.lane.b32.xlu0 %v676, 125
        %v698 = vpop.permute.xlu0 %697
        %v701 = vadd.f32 %v693, %v696
        %v702 = vadd.f32 %v694, %v698
        %703 = vrot.lane.b32.xlu0 %v675, 124
        %v704 = vpop.permute.xlu0 %703
        %705 = vrot.lane.b32.xlu0 %v676, 124
        %v706 = vpop.permute.xlu0 %705
        %v709 = vadd.f32 %v701, %v704
        %v710 = vadd.f32 %v702, %v706
        %v711 = vmul.f32 %v562, %v562
        %v712 = vmul.f32 %v559, %v559
        %v713 = vmul.f32 %v565, %v565
        %v716 = vrot.slane %v711, 1
        %v717 = vrot.slane %v712, 1
        %v718 = vsel %vm583, %v716, %v717
        %v721 = vadd.f32 %v711, %v718
        %v722 = vadd.f32 %v712, %v717
        %v723 = vrot.slane %v712, 2
        %v725 = vadd.f32 %v721, %v723
        %v726 = vadd.f32 %v722, %v723
        %v728 = vrot.slane %v712, 3
        %v729 = vrot.slane %v713, 3
        %v730 = vsel %vm596, %v728, %v729
        %v733 = vadd.f32 %v725, %v728
        %v734 = vadd.f32 %v726, %v730
        %v735 = vrot.slane %v712, 4
        %v736 = vrot.slane %v713, 4
        %v737 = vsel %vm604, %v735, %v736
        %v740 = vadd.f32 %v733, %v735
        %v741 = vadd.f32 %v734, %v737
        %744 = vrot.lane.b32.xlu0 %v740, 127
        %v745 = vpop.permute.xlu0 %744
        %746 = vrot.lane.b32.xlu0 %v741, 127
        %v747 = vpop.permute.xlu0 %746
        %v750 = vadd.f32 %v740, %v745
        %v751 = vadd.f32 %v741, %v747
        %752 = vrot.lane.b32.xlu0 %v740, 126
        %v753 = vpop.permute.xlu0 %752
        %754 = vrot.lane.b32.xlu0 %v741, 126
        %v755 = vpop.permute.xlu0 %754
        %v758 = vadd.f32 %v750, %v753
        %v759 = vadd.f32 %v751, %v755
        %760 = vrot.lane.b32.xlu0 %v740, 125
        %v761 = vpop.permute.xlu0 %760
        %762 = vrot.lane.b32.xlu0 %v741, 125
        %v763 = vpop.permute.xlu0 %762
        %v766 = vadd.f32 %v758, %v761
        %v767 = vadd.f32 %v759, %v763
        %768 = vrot.lane.b32.xlu0 %v740, 124
        %v769 = vpop.permute.xlu0 %768
        %770 = vrot.lane.b32.xlu0 %v741, 124
        %v771 = vpop.permute.xlu0 %770
        %v774 = vadd.f32 %v766, %v769
        %v775 = vadd.f32 %v767, %v771
        %v776 = vmul.f32 %v569, %v575
        %v777 = vmul.f32 %v570, %v576
        %v778 = vmul.f32 %v571, %v577
        %v781 = vrot.slane %v776, 1
        %v782 = vrot.slane %v777, 1
        %v783 = vsel %vm583, %v781, %v782
        %v786 = vadd.f32 %v776, %v783
        %v787 = vadd.f32 %v777, %v782
        %v788 = vrot.slane %v777, 2
        %v790 = vadd.f32 %v786, %v788
        %v791 = vadd.f32 %v787, %v788
        %v793 = vrot.slane %v777, 3
        %v794 = vrot.slane %v778, 3
        %v795 = vsel %vm596, %v793, %v794
        %v798 = vadd.f32 %v790, %v793
        %v799 = vadd.f32 %v791, %v795
        %v800 = vrot.slane %v777, 4
        %v801 = vrot.slane %v778, 4
        %v802 = vsel %vm604, %v800, %v801
        %v805 = vadd.f32 %v798, %v800
        %v806 = vadd.f32 %v799, %v802
        %809 = vrot.lane.b32.xlu0 %v805, 127
        %v810 = vpop.permute.xlu0 %809
        %811 = vrot.lane.b32.xlu0 %v806, 127
        %v812 = vpop.permute.xlu0 %811
        %v815 = vadd.f32 %v805, %v810
        %v816 = vadd.f32 %v806, %v812
        %817 = vrot.lane.b32.xlu0 %v805, 126
        %v818 = vpop.permute.xlu0 %817
        %819 = vrot.lane.b32.xlu0 %v806, 126
        %v820 = vpop.permute.xlu0 %819
        %v823 = vadd.f32 %v815, %v818
        %v824 = vadd.f32 %v816, %v820
        %825 = vrot.lane.b32.xlu0 %v805, 125
        %v826 = vpop.permute.xlu0 %825
        %827 = vrot.lane.b32.xlu0 %v806, 125
        %v828 = vpop.permute.xlu0 %827
        %v831 = vadd.f32 %v823, %v826
        %v832 = vadd.f32 %v824, %v828
        %833 = vrot.lane.b32.xlu0 %v805, 124
        %v834 = vpop.permute.xlu0 %833
        %835 = vrot.lane.b32.xlu0 %v806, 124
        %v836 = vpop.permute.xlu0 %835
        %v839 = vadd.f32 %v831, %v834
        %v840 = vadd.f32 %v832, %v836
        %v841 = vmul.f32 %v569, %v562
        %v842 = vmul.f32 %v570, %v559
        %v843 = vmul.f32 %v571, %v565
        %v846 = vrot.slane %v841, 1
        %v847 = vrot.slane %v842, 1
        %v848 = vsel %vm583, %v846, %v847
        %v851 = vadd.f32 %v841, %v848
        %v852 = vadd.f32 %v842, %v847
        %v853 = vrot.slane %v842, 2
        %v855 = vadd.f32 %v851, %v853
        %v856 = vadd.f32 %v852, %v853
        %v858 = vrot.slane %v842, 3
        %v859 = vrot.slane %v843, 3
        %v860 = vsel %vm596, %v858, %v859
        %v863 = vadd.f32 %v855, %v858
        %v864 = vadd.f32 %v856, %v860
        %v865 = vrot.slane %v842, 4
        %v866 = vrot.slane %v843, 4
        %v867 = vsel %vm604, %v865, %v866
        %v870 = vadd.f32 %v863, %v865
        %v871 = vadd.f32 %v864, %v867
        %874 = vrot.lane.b32.xlu0 %v870, 127
        %v875 = vpop.permute.xlu0 %874
        %876 = vrot.lane.b32.xlu0 %v871, 127
        %v877 = vpop.permute.xlu0 %876
        %v880 = vadd.f32 %v870, %v875
        %v881 = vadd.f32 %v871, %v877
        %882 = vrot.lane.b32.xlu0 %v870, 126
        %v883 = vpop.permute.xlu0 %882
        %884 = vrot.lane.b32.xlu0 %v871, 126
        %v885 = vpop.permute.xlu0 %884
        %v888 = vadd.f32 %v880, %v883
        %v889 = vadd.f32 %v881, %v885
        %890 = vrot.lane.b32.xlu0 %v870, 125
        %v891 = vpop.permute.xlu0 %890
        %892 = vrot.lane.b32.xlu0 %v871, 125
        %v893 = vpop.permute.xlu0 %892
        %v896 = vadd.f32 %v888, %v891
        %v897 = vadd.f32 %v889, %v893
        %898 = vrot.lane.b32.xlu0 %v870, 124
        %v899 = vpop.permute.xlu0 %898
        %900 = vrot.lane.b32.xlu0 %v871, 124
        %v901 = vpop.permute.xlu0 %900
        %v904 = vadd.f32 %v896, %v899
        %v905 = vadd.f32 %v897, %v901
        %v906 = vmul.f32 %v575, %v562
        %v907 = vmul.f32 %v576, %v559
        %v908 = vmul.f32 %v577, %v565
        %v911 = vrot.slane %v906, 1
        %v912 = vrot.slane %v907, 1
        %v913 = vsel %vm583, %v911, %v912
        %v916 = vadd.f32 %v906, %v913
        %v917 = vadd.f32 %v907, %v912
        %v918 = vrot.slane %v907, 2
        %v920 = vadd.f32 %v916, %v918
        %v921 = vadd.f32 %v917, %v918
        %v923 = vrot.slane %v907, 3
        %v924 = vrot.slane %v908, 3
        %v925 = vsel %vm596, %v923, %v924
        %v928 = vadd.f32 %v920, %v923
        %v929 = vadd.f32 %v921, %v925
        %v930 = vrot.slane %v907, 4
        %v931 = vrot.slane %v908, 4
        %v932 = vsel %vm604, %v930, %v931
        %v935 = vadd.f32 %v928, %v930
        %v936 = vadd.f32 %v929, %v932
        %939 = vrot.lane.b32.xlu0 %v935, 127
        %v940 = vpop.permute.xlu0 %939
        %941 = vrot.lane.b32.xlu0 %v936, 127
        %v942 = vpop.permute.xlu0 %941
        %v945 = vadd.f32 %v935, %v940
        %v946 = vadd.f32 %v936, %v942
        %947 = vrot.lane.b32.xlu0 %v935, 126
        %v948 = vpop.permute.xlu0 %947
        %949 = vrot.lane.b32.xlu0 %v936, 126
        %v950 = vpop.permute.xlu0 %949
        %v953 = vadd.f32 %v945, %v948
        %v954 = vadd.f32 %v946, %v950
        %955 = vrot.lane.b32.xlu0 %v935, 125
        %v956 = vpop.permute.xlu0 %955
        %957 = vrot.lane.b32.xlu0 %v936, 125
        %v958 = vpop.permute.xlu0 %957
        %v961 = vadd.f32 %v953, %v956
        %v962 = vadd.f32 %v954, %v958
        %963 = vrot.lane.b32.xlu0 %v935, 124
        %v964 = vpop.permute.xlu0 %963
        %965 = vrot.lane.b32.xlu0 %v936, 124
        %v966 = vpop.permute.xlu0 %965
        %v969 = vadd.f32 %v961, %v964
        %v970 = vadd.f32 %v962, %v966
        %v973 = vrot.slane %v569, 1
        %v974 = vrot.slane %v570, 1
        %v975 = vsel %vm583, %v973, %v974
        %v978 = vadd.f32 %v569, %v975
        %v979 = vadd.f32 %v570, %v974
        %v980 = vrot.slane %v570, 2
        %v982 = vadd.f32 %v978, %v980
        %v983 = vadd.f32 %v979, %v980
        %v985 = vrot.slane %v570, 3
        %v986 = vrot.slane %v571, 3
        %v987 = vsel %vm596, %v985, %v986
        %v990 = vadd.f32 %v982, %v985
        %v991 = vadd.f32 %v983, %v987
        %v992 = vrot.slane %v570, 4
        %v993 = vrot.slane %v571, 4
        %v994 = vsel %vm604, %v992, %v993
        %v997 = vadd.f32 %v990, %v992
        %v998 = vadd.f32 %v991, %v994
        %1001 = vrot.lane.b32.xlu0 %v997, 127
        %v1002 = vpop.permute.xlu0 %1001
        %1003 = vrot.lane.b32.xlu0 %v998, 127
        %v1004 = vpop.permute.xlu0 %1003
        %v1007 = vadd.f32 %v997, %v1002
        %v1008 = vadd.f32 %v998, %v1004
        %1009 = vrot.lane.b32.xlu0 %v997, 126
        %v1010 = vpop.permute.xlu0 %1009
        %1011 = vrot.lane.b32.xlu0 %v998, 126
        %v1012 = vpop.permute.xlu0 %1011
        %v1015 = vadd.f32 %v1007, %v1010
        %v1016 = vadd.f32 %v1008, %v1012
        %1017 = vrot.lane.b32.xlu0 %v997, 125
        %v1018 = vpop.permute.xlu0 %1017
        %1019 = vrot.lane.b32.xlu0 %v998, 125
        %v1020 = vpop.permute.xlu0 %1019
        %v1023 = vadd.f32 %v1015, %v1018
        %v1024 = vadd.f32 %v1016, %v1020
        %1025 = vrot.lane.b32.xlu0 %v997, 124
        %v1026 = vpop.permute.xlu0 %1025
        %1027 = vrot.lane.b32.xlu0 %v998, 124
        %v1028 = vpop.permute.xlu0 %1027
        %v1031 = vadd.f32 %v1023, %v1026
        %v1032 = vadd.f32 %v1024, %v1028
        %v1035 = vrot.slane %v575, 1
        %v1036 = vrot.slane %v576, 1
        %v1037 = vsel %vm583, %v1035, %v1036
        %v1040 = vadd.f32 %v575, %v1037
        %v1041 = vadd.f32 %v576, %v1036
        %v1042 = vrot.slane %v576, 2
        %v1044 = vadd.f32 %v1040, %v1042
        %v1045 = vadd.f32 %v1041, %v1042
        %v1047 = vrot.slane %v576, 3
        %v1048 = vrot.slane %v577, 3
        %v1049 = vsel %vm596, %v1047, %v1048
        %v1052 = vadd.f32 %v1044, %v1047
        %v1053 = vadd.f32 %v1045, %v1049
        %v1054 = vrot.slane %v576, 4
        %v1055 = vrot.slane %v577, 4
        %v1056 = vsel %vm604, %v1054, %v1055
        %v1059 = vadd.f32 %v1052, %v1054
        %v1060 = vadd.f32 %v1053, %v1056
        %1063 = vrot.lane.b32.xlu0 %v1059, 127
        %v1064 = vpop.permute.xlu0 %1063
        %1065 = vrot.lane.b32.xlu0 %v1060, 127
        %v1066 = vpop.permute.xlu0 %1065
        %v1069 = vadd.f32 %v1059, %v1064
        %v1070 = vadd.f32 %v1060, %v1066
        %1071 = vrot.lane.b32.xlu0 %v1059, 126
        %v1072 = vpop.permute.xlu0 %1071
        %1073 = vrot.lane.b32.xlu0 %v1060, 126
        %v1074 = vpop.permute.xlu0 %1073
        %v1077 = vadd.f32 %v1069, %v1072
        %v1078 = vadd.f32 %v1070, %v1074
        %1079 = vrot.lane.b32.xlu0 %v1059, 125
        %v1080 = vpop.permute.xlu0 %1079
        %1081 = vrot.lane.b32.xlu0 %v1060, 125
        %v1082 = vpop.permute.xlu0 %1081
        %v1085 = vadd.f32 %v1077, %v1080
        %v1086 = vadd.f32 %v1078, %v1082
        %1087 = vrot.lane.b32.xlu0 %v1059, 124
        %v1088 = vpop.permute.xlu0 %1087
        %1089 = vrot.lane.b32.xlu0 %v1060, 124
        %v1090 = vpop.permute.xlu0 %1089
        %v1093 = vadd.f32 %v1085, %v1088
        %v1094 = vadd.f32 %v1086, %v1090
        %v1097 = vrot.slane %v562, 1
        %v1098 = vrot.slane %v559, 1
        %v1099 = vsel %vm583, %v1097, %v1098
        %v1102 = vadd.f32 %v562, %v1099
        %v1103 = vadd.f32 %v559, %v1098
        %v1104 = vrot.slane %v559, 2
        %v1106 = vadd.f32 %v1102, %v1104
        %v1107 = vadd.f32 %v1103, %v1104
        %v1109 = vrot.slane %v559, 3
        %v1110 = vrot.slane %v565, 3
        %v1111 = vsel %vm596, %v1109, %v1110
        %v1114 = vadd.f32 %v1106, %v1109
        %v1115 = vadd.f32 %v1107, %v1111
        %v1116 = vrot.slane %v559, 4
        %v1117 = vrot.slane %v565, 4
        %v1118 = vsel %vm604, %v1116, %v1117
        %v1121 = vadd.f32 %v1114, %v1116
        %v1122 = vadd.f32 %v1115, %v1118
        %1125 = vrot.lane.b32.xlu0 %v1121, 127
        %v1126 = vpop.permute.xlu0 %1125
        %1127 = vrot.lane.b32.xlu0 %v1122, 127
        %v1128 = vpop.permute.xlu0 %1127
        %v1131 = vadd.f32 %v1121, %v1126
        %v1132 = vadd.f32 %v1122, %v1128
        %1133 = vrot.lane.b32.xlu0 %v1121, 126
        %v1134 = vpop.permute.xlu0 %1133
        %1135 = vrot.lane.b32.xlu0 %v1122, 126
        %v1136 = vpop.permute.xlu0 %1135
        %v1139 = vadd.f32 %v1131, %v1134
        %v1140 = vadd.f32 %v1132, %v1136
        %1141 = vrot.lane.b32.xlu0 %v1121, 125
        %v1142 = vpop.permute.xlu0 %1141
        %1143 = vrot.lane.b32.xlu0 %v1122, 125
        %v1144 = vpop.permute.xlu0 %1143
        %v1147 = vadd.f32 %v1139, %v1142
        %v1148 = vadd.f32 %v1140, %v1144
        %1149 = vrot.lane.b32.xlu0 %v1121, 124
        %v1150 = vpop.permute.xlu0 %1149
        %1151 = vrot.lane.b32.xlu0 %v1122, 124
        %v1152 = vpop.permute.xlu0 %1151
        %v1155 = vadd.f32 %v1147, %v1150
        %v1156 = vadd.f32 %v1148, %v1152
        %v1157 = vadd.f32 %v644, 1e-06
        %v1158 = vadd.f32 %v645, 1e-06
        %v1159 = vadd.f32 %v709, 1e-06
        %v1160 = vadd.f32 %v710, 1e-06
        %v1161 = vadd.f32 %v774, 1e-06
        %v1162 = vadd.f32 %v775, 1e-06
        %v1163 = vmul.f32 %v1159, %v1161
        %v1164 = vmul.f32 %v1160, %v1162
        %v1165 = vmul.f32 %v969, %v969
        %v1166 = vmul.f32 %v970, %v970
        %v1167 = vsub.f32 %v1163, %v1165
        %v1168 = vsub.f32 %v1164, %v1166
        %v1169 = vmul.f32 %v904, %v969
        %v1170 = vmul.f32 %v905, %v970
        %v1171 = vmul.f32 %v839, %v1161
        %v1172 = vmul.f32 %v840, %v1162
        %v1173 = vsub.f32 %v1169, %v1171
        %v1174 = vsub.f32 %v1170, %v1172
        %v1175 = vmul.f32 %v839, %v969
        %v1176 = vmul.f32 %v840, %v970
        %v1177 = vmul.f32 %v904, %v1159
        %v1178 = vmul.f32 %v905, %v1160
        %v1179 = vsub.f32 %v1175, %v1177
        %v1180 = vsub.f32 %v1176, %v1178
        %v1181 = vmul.f32 %v1157, %v1161
        %v1182 = vmul.f32 %v1158, %v1162
        %v1183 = vmul.f32 %v904, %v904
        %v1184 = vmul.f32 %v905, %v905
        %v1185 = vsub.f32 %v1181, %v1183
        %v1186 = vsub.f32 %v1182, %v1184
        %v1187 = vmul.f32 %v839, %v904
        %v1188 = vmul.f32 %v840, %v905
        %v1189 = vmul.f32 %v1157, %v969
        %v1190 = vmul.f32 %v1158, %v970
        %v1191 = vsub.f32 %v1187, %v1189
        %v1192 = vsub.f32 %v1188, %v1190
        %v1193 = vmul.f32 %v1157, %v1159
        %v1194 = vmul.f32 %v1158, %v1160
        %v1195 = vmul.f32 %v839, %v839
        %v1196 = vmul.f32 %v840, %v840
        %v1197 = vsub.f32 %v1193, %v1195
        %v1198 = vsub.f32 %v1194, %v1196
        %v1199 = vmul.f32 %v1157, %v1167
        %v1200 = vmul.f32 %v1158, %v1168
        %v1201 = vmul.f32 %v839, %v1173
        %v1202 = vmul.f32 %v840, %v1174
        %v1203 = vadd.f32 %v1199, %v1201
        %v1204 = vadd.f32 %v1200, %v1202
        %v1205 = vmul.f32 %v904, %v1179
        %v1206 = vmul.f32 %v905, %v1180
        %v1207 = vadd.f32 %v1203, %v1205
        %v1208 = vadd.f32 %v1204, %v1206
        %v1209 = vrcp.pop %v1207
        %v1210 = vmul.f32 1.0, %v1209
        %v1211 = vrcp.pop %v1208
        %v1212 = vmul.f32 1.0, %v1211
        %v1213 = vmul.f32 %v1167, %v1031
        %v1214 = vmul.f32 %v1168, %v1032
        %v1215 = vmul.f32 %v1173, %v1093
        %v1216 = vmul.f32 %v1174, %v1094
        %v1217 = vadd.f32 %v1213, %v1215
        %v1218 = vadd.f32 %v1214, %v1216
        %v1219 = vmul.f32 %v1179, %v1155
        %v1220 = vmul.f32 %v1180, %v1156
        %v1221 = vadd.f32 %v1217, %v1219
        %v1222 = vadd.f32 %v1218, %v1220
        %v1223 = vmul.f32 %v1221, %v1210
        %v1224 = vmul.f32 %v1222, %v1212
        %v1225 = vmul.f32 %v1173, %v1031
        %v1226 = vmul.f32 %v1174, %v1032
        %v1227 = vmul.f32 %v1185, %v1093
        %v1228 = vmul.f32 %v1186, %v1094
        %v1229 = vadd.f32 %v1225, %v1227
        %v1230 = vadd.f32 %v1226, %v1228
        %v1231 = vmul.f32 %v1191, %v1155
        %v1232 = vmul.f32 %v1192, %v1156
        %v1233 = vadd.f32 %v1229, %v1231
        %v1234 = vadd.f32 %v1230, %v1232
        %v1235 = vmul.f32 %v1233, %v1210
        %v1236 = vmul.f32 %v1234, %v1212
        %v1237 = vmul.f32 %v1179, %v1031
        %v1238 = vmul.f32 %v1180, %v1032
        %v1239 = vmul.f32 %v1191, %v1093
        %v1240 = vmul.f32 %v1192, %v1094
        %v1241 = vadd.f32 %v1237, %v1239
        %v1242 = vadd.f32 %v1238, %v1240
        %v1243 = vmul.f32 %v1197, %v1155
        %v1244 = vmul.f32 %v1198, %v1156
        %v1245 = vadd.f32 %v1241, %v1243
        %v1246 = vadd.f32 %v1242, %v1244
        %v1247 = vmul.f32 %v1245, %v1210
        %v1248 = vmul.f32 %v1246, %v1212
        %v1249 = vmul.f32 %v1223, %v1223
        %v1250 = vmul.f32 %v1224, %v1224
        %v1251 = vmul.f32 %v1235, %v1235
        %v1252 = vmul.f32 %v1236, %v1236
        %v1253 = vadd.f32 %v1249, %v1251
        %v1254 = vadd.f32 %v1250, %v1252
        %v1255 = vmul.f32 %v1247, %v1247
        %v1256 = vmul.f32 %v1248, %v1248
        %v1257 = vadd.f32 %v1253, %v1255
        %v1258 = vadd.f32 %v1254, %v1256
        %v1259 = vrsqrt.pop %v1257
        %v1260 = vrsqrt.pop %v1258
        %v1261 = vmul.f32 %v1223, %v1259
        %v1262 = vmul.f32 %v1224, %v1260
        %v1263 = vmul.f32 %v1235, %v1259
        %v1264 = vmul.f32 %v1236, %v1260
        %v1265 = vmul.f32 %v1247, %v1259
        %v1266 = vmul.f32 %v1248, %v1260
        %1267 = vrot.lane.b32.xlu0 %v980, 126
        %v1268 = vpop.permute.xlu0 %1267
        %v1270 = vmul.f32 %v1261, %v1268
        %v1271 = vmul.f32 %v1262, %v1268
        %1272 = vrot.lane.b32.xlu0 %v1042, 126
        %v1273 = vpop.permute.xlu0 %1272
        %v1275 = vmul.f32 %v1263, %v1273
        %v1276 = vmul.f32 %v1264, %v1273
        %v1277 = vadd.f32 %v1270, %v1275
        %v1278 = vadd.f32 %v1271, %v1276
        %1279 = vrot.lane.b32.xlu0 %v1104, 126
        %v1280 = vpop.permute.xlu0 %1279
        %v1282 = vmul.f32 %v1265, %v1280
        %v1283 = vmul.f32 %v1266, %v1280
        %v1284 = vadd.f32 %v1277, %v1282
        %v1285 = vadd.f32 %v1278, %v1283
        %vm1286 = vcmp.gt.f32.partialorder %v1284, 0.0
        %vm1287 = vcmp.gt.f32.partialorder %v1285, 0.0
        %v1288 = vsel %vm1286, -1.0, 1.0
        %v1289 = vsel %vm1287, -1.0, 1.0
        %v1290 = vmul.f32 %v1261, %v1288
        %v1291 = vmul.f32 %v1262, %v1289
        %v1292 = vmul.f32 %v1263, %v1288
        %v1293 = vmul.f32 %v1264, %v1289
        %v1294 = vmul.f32 %v1265, %v1288
        %v1295 = vmul.f32 %v1266, %v1289
        %vm1296 = vcmp.gt.f32.partialorder %v559, 0.0
        %vm1299 = vcmask 1041408
        %v1300 = vrot.slane %v1290, 6
        %v1301 = vrot.slane %v1291, 6
        %v1302 = vsel %vm1299, %v1300, %v1301
        %1303 = vrot.lane.b32.xlu0 %v1302, 2
        %v1304 = vpop.permute.xlu0 %1303
        %v1306 = vsel %vm1296, %v1304, 0.0
        %v1309 = vrot.slane %v1292, 6
        %v1310 = vrot.slane %v1293, 6
        %v1311 = vsel %vm1299, %v1309, %v1310
        %1312 = vrot.lane.b32.xlu0 %v1311, 2
        %v1313 = vpop.permute.xlu0 %1312
        %v1315 = vsel %vm1296, %v1313, 0.0
        %v1318 = vrot.slane %v1294, 6
        %v1319 = vrot.slane %v1295, 6
        %v1320 = vsel %vm1299, %v1318, %v1319
        %1321 = vrot.lane.b32.xlu0 %v1320, 2
        %v1322 = vpop.permute.xlu0 %1321
        %v1324 = vsel %vm1296, %v1322, 0.0
        %v1325 = vld [vmem:[%s430] sm:$0xff]
        %v1326 = vld [vmem:[%s421] sm:$0xff]
        %v1327 = vmul.f32 %v1326, %v561
        %v1328 = vld [vmem:[%s439] sm:$0xff]
        %v1329 = vmul.f32 %v1328, %v564
        %v1330 = vmul.f32 %v558, %v1327
        %v1331 = vmul.f32 %v558, %v1325
        %v1332 = vmul.f32 %v558, %v1329
        %v1333 = vmul.f32 %v1330, 0.125
        %v1334 = vmul.f32 %v1331, 0.125
        %v1335 = vmul.f32 %v1332, 0.125
        %v1336 = vmul.f32 %v554, %v1327
        %v1337 = vmul.f32 %v555, %v1325
        %v1338 = vmul.f32 %v556, %v1329
        %v1339 = vmul.f32 %v1336, 0.125
        %v1340 = vmul.f32 %v1337, 0.125
        %v1341 = vmul.f32 %v1338, 0.125
        %v1342 = vmul.f32 %v1333, %v1333
        %v1343 = vmul.f32 %v1334, %v1334
        %v1344 = vmul.f32 %v1335, %v1335
        %v1347 = vrot.slane %v1342, 1
        %v1348 = vrot.slane %v1343, 1
        %v1349 = vsel %vm583, %v1347, %v1348
        %v1352 = vadd.f32 %v1342, %v1349
        %v1353 = vadd.f32 %v1343, %v1348
        %v1354 = vrot.slane %v1343, 2
        %v1356 = vadd.f32 %v1352, %v1354
        %v1357 = vadd.f32 %v1353, %v1354
        %v1359 = vrot.slane %v1343, 3
        %v1360 = vrot.slane %v1344, 3
        %v1361 = vsel %vm596, %v1359, %v1360
        %v1364 = vadd.f32 %v1356, %v1359
        %v1365 = vadd.f32 %v1357, %v1361
        %v1366 = vrot.slane %v1343, 4
        %v1367 = vrot.slane %v1344, 4
        %v1368 = vsel %vm604, %v1366, %v1367
        %v1371 = vadd.f32 %v1364, %v1366
        %v1372 = vadd.f32 %v1365, %v1368
        %1375 = vrot.lane.b32.xlu0 %v1371, 127
        %v1376 = vpop.permute.xlu0 %1375
        %1377 = vrot.lane.b32.xlu0 %v1372, 127
        %v1378 = vpop.permute.xlu0 %1377
        %v1381 = vadd.f32 %v1371, %v1376
        %v1382 = vadd.f32 %v1372, %v1378
        %1383 = vrot.lane.b32.xlu0 %v1371, 126
        %v1384 = vpop.permute.xlu0 %1383
        %1385 = vrot.lane.b32.xlu0 %v1372, 126
        %v1386 = vpop.permute.xlu0 %1385
        %v1389 = vadd.f32 %v1381, %v1384
        %v1390 = vadd.f32 %v1382, %v1386
        %1391 = vrot.lane.b32.xlu0 %v1371, 125
        %v1392 = vpop.permute.xlu0 %1391
        %1393 = vrot.lane.b32.xlu0 %v1372, 125
        %v1394 = vpop.permute.xlu0 %1393
        %v1397 = vadd.f32 %v1389, %v1392
        %v1398 = vadd.f32 %v1390, %v1394
        %1399 = vrot.lane.b32.xlu0 %v1371, 124
        %v1400 = vpop.permute.xlu0 %1399
        %1401 = vrot.lane.b32.xlu0 %v1372, 124
        %v1402 = vpop.permute.xlu0 %1401
        %v1405 = vadd.f32 %v1397, %v1400
        %v1406 = vadd.f32 %v1398, %v1402
        %v1407 = vmul.f32 %v1339, %v1339
        %v1408 = vmul.f32 %v1340, %v1340
        %v1409 = vmul.f32 %v1341, %v1341
        %v1412 = vrot.slane %v1407, 1
        %v1413 = vrot.slane %v1408, 1
        %v1414 = vsel %vm583, %v1412, %v1413
        %v1417 = vadd.f32 %v1407, %v1414
        %v1418 = vadd.f32 %v1408, %v1413
        %v1419 = vrot.slane %v1408, 2
        %v1421 = vadd.f32 %v1417, %v1419
        %v1422 = vadd.f32 %v1418, %v1419
        %v1424 = vrot.slane %v1408, 3
        %v1425 = vrot.slane %v1409, 3
        %v1426 = vsel %vm596, %v1424, %v1425
        %v1429 = vadd.f32 %v1421, %v1424
        %v1430 = vadd.f32 %v1422, %v1426
        %v1431 = vrot.slane %v1408, 4
        %v1432 = vrot.slane %v1409, 4
        %v1433 = vsel %vm604, %v1431, %v1432
        %v1436 = vadd.f32 %v1429, %v1431
        %v1437 = vadd.f32 %v1430, %v1433
        %1440 = vrot.lane.b32.xlu0 %v1436, 127
        %v1441 = vpop.permute.xlu0 %1440
        %1442 = vrot.lane.b32.xlu0 %v1437, 127
        %v1443 = vpop.permute.xlu0 %1442
        %v1446 = vadd.f32 %v1436, %v1441
        %v1447 = vadd.f32 %v1437, %v1443
        %1448 = vrot.lane.b32.xlu0 %v1436, 126
        %v1449 = vpop.permute.xlu0 %1448
        %1450 = vrot.lane.b32.xlu0 %v1437, 126
        %v1451 = vpop.permute.xlu0 %1450
        %v1454 = vadd.f32 %v1446, %v1449
        %v1455 = vadd.f32 %v1447, %v1451
        %1456 = vrot.lane.b32.xlu0 %v1436, 125
        %v1457 = vpop.permute.xlu0 %1456
        %1458 = vrot.lane.b32.xlu0 %v1437, 125
        %v1459 = vpop.permute.xlu0 %1458
        %v1462 = vadd.f32 %v1454, %v1457
        %v1463 = vadd.f32 %v1455, %v1459
        %1464 = vrot.lane.b32.xlu0 %v1436, 124
        %v1465 = vpop.permute.xlu0 %1464
        %1466 = vrot.lane.b32.xlu0 %v1437, 124
        %v1467 = vpop.permute.xlu0 %1466
        %v1470 = vadd.f32 %v1462, %v1465
        %v1471 = vadd.f32 %v1463, %v1467
        %v1472 = vmul.f32 %v1327, %v1327
        %v1473 = vmul.f32 %v1325, %v1325
        %v1474 = vmul.f32 %v1329, %v1329
        %v1477 = vrot.slane %v1472, 1
        %v1478 = vrot.slane %v1473, 1
        %v1479 = vsel %vm583, %v1477, %v1478
        %v1482 = vadd.f32 %v1472, %v1479
        %v1483 = vadd.f32 %v1473, %v1478
        %v1484 = vrot.slane %v1473, 2
        %v1486 = vadd.f32 %v1482, %v1484
        %v1487 = vadd.f32 %v1483, %v1484
        %v1489 = vrot.slane %v1473, 3
        %v1490 = vrot.slane %v1474, 3
        %v1491 = vsel %vm596, %v1489, %v1490
        %v1494 = vadd.f32 %v1486, %v1489
        %v1495 = vadd.f32 %v1487, %v1491
        %v1496 = vrot.slane %v1473, 4
        %v1497 = vrot.slane %v1474, 4
        %v1498 = vsel %vm604, %v1496, %v1497
        %v1501 = vadd.f32 %v1494, %v1496
        %v1502 = vadd.f32 %v1495, %v1498
        %1505 = vrot.lane.b32.xlu0 %v1501, 127
        %v1506 = vpop.permute.xlu0 %1505
        %1507 = vrot.lane.b32.xlu0 %v1502, 127
        %v1508 = vpop.permute.xlu0 %1507
        %v1511 = vadd.f32 %v1501, %v1506
        %v1512 = vadd.f32 %v1502, %v1508
        %1513 = vrot.lane.b32.xlu0 %v1501, 126
        %v1514 = vpop.permute.xlu0 %1513
        %1515 = vrot.lane.b32.xlu0 %v1502, 126
        %v1516 = vpop.permute.xlu0 %1515
        %v1519 = vadd.f32 %v1511, %v1514
        %v1520 = vadd.f32 %v1512, %v1516
        %1521 = vrot.lane.b32.xlu0 %v1501, 125
        %v1522 = vpop.permute.xlu0 %1521
        %1523 = vrot.lane.b32.xlu0 %v1502, 125
        %v1524 = vpop.permute.xlu0 %1523
        %v1527 = vadd.f32 %v1519, %v1522
        %v1528 = vadd.f32 %v1520, %v1524
        %1529 = vrot.lane.b32.xlu0 %v1501, 124
        %v1530 = vpop.permute.xlu0 %1529
        %1531 = vrot.lane.b32.xlu0 %v1502, 124
        %v1532 = vpop.permute.xlu0 %1531
        %v1535 = vadd.f32 %v1527, %v1530
        %v1536 = vadd.f32 %v1528, %v1532
        %v1537 = vmul.f32 %v1333, %v1339
        %v1538 = vmul.f32 %v1334, %v1340
        %v1539 = vmul.f32 %v1335, %v1341
        %v1542 = vrot.slane %v1537, 1
        %v1543 = vrot.slane %v1538, 1
        %v1544 = vsel %vm583, %v1542, %v1543
        %v1547 = vadd.f32 %v1537, %v1544
        %v1548 = vadd.f32 %v1538, %v1543
        %v1549 = vrot.slane %v1538, 2
        %v1551 = vadd.f32 %v1547, %v1549
        %v1552 = vadd.f32 %v1548, %v1549
        %v1554 = vrot.slane %v1538, 3
        %v1555 = vrot.slane %v1539, 3
        %v1556 = vsel %vm596, %v1554, %v1555
        %v1559 = vadd.f32 %v1551, %v1554
        %v1560 = vadd.f32 %v1552, %v1556
        %v1561 = vrot.slane %v1538, 4
        %v1562 = vrot.slane %v1539, 4
        %v1563 = vsel %vm604, %v1561, %v1562
        %v1566 = vadd.f32 %v1559, %v1561
        %v1567 = vadd.f32 %v1560, %v1563
        %1570 = vrot.lane.b32.xlu0 %v1566, 127
        %v1571 = vpop.permute.xlu0 %1570
        %1572 = vrot.lane.b32.xlu0 %v1567, 127
        %v1573 = vpop.permute.xlu0 %1572
        %v1576 = vadd.f32 %v1566, %v1571
        %v1577 = vadd.f32 %v1567, %v1573
        %1578 = vrot.lane.b32.xlu0 %v1566, 126
        %v1579 = vpop.permute.xlu0 %1578
        %1580 = vrot.lane.b32.xlu0 %v1567, 126
        %v1581 = vpop.permute.xlu0 %1580
        %v1584 = vadd.f32 %v1576, %v1579
        %v1585 = vadd.f32 %v1577, %v1581
        %1586 = vrot.lane.b32.xlu0 %v1566, 125
        %v1587 = vpop.permute.xlu0 %1586
        %1588 = vrot.lane.b32.xlu0 %v1567, 125
        %v1589 = vpop.permute.xlu0 %1588
        %v1592 = vadd.f32 %v1584, %v1587
        %v1593 = vadd.f32 %v1585, %v1589
        %1594 = vrot.lane.b32.xlu0 %v1566, 124
        %v1595 = vpop.permute.xlu0 %1594
        %1596 = vrot.lane.b32.xlu0 %v1567, 124
        %v1597 = vpop.permute.xlu0 %1596
        %v1600 = vadd.f32 %v1592, %v1595
        %v1601 = vadd.f32 %v1593, %v1597
        %v1602 = vmul.f32 %v1333, %v1327
        %v1603 = vmul.f32 %v1334, %v1325
        %v1604 = vmul.f32 %v1335, %v1329
        %v1607 = vrot.slane %v1602, 1
        %v1608 = vrot.slane %v1603, 1
        %v1609 = vsel %vm583, %v1607, %v1608
        %v1612 = vadd.f32 %v1602, %v1609
        %v1613 = vadd.f32 %v1603, %v1608
        %v1614 = vrot.slane %v1603, 2
        %v1616 = vadd.f32 %v1612, %v1614
        %v1617 = vadd.f32 %v1613, %v1614
        %v1619 = vrot.slane %v1603, 3
        %v1620 = vrot.slane %v1604, 3
        %v1621 = vsel %vm596, %v1619, %v1620
        %v1624 = vadd.f32 %v1616, %v1619
        %v1625 = vadd.f32 %v1617, %v1621
        %v1626 = vrot.slane %v1603, 4
        %v1627 = vrot.slane %v1604, 4
        %v1628 = vsel %vm604, %v1626, %v1627
        %v1631 = vadd.f32 %v1624, %v1626
        %v1632 = vadd.f32 %v1625, %v1628
        %1635 = vrot.lane.b32.xlu0 %v1631, 127
        %v1636 = vpop.permute.xlu0 %1635
        %1637 = vrot.lane.b32.xlu0 %v1632, 127
        %v1638 = vpop.permute.xlu0 %1637
        %v1641 = vadd.f32 %v1631, %v1636
        %v1642 = vadd.f32 %v1632, %v1638
        %1643 = vrot.lane.b32.xlu0 %v1631, 126
        %v1644 = vpop.permute.xlu0 %1643
        %1645 = vrot.lane.b32.xlu0 %v1632, 126
        %v1646 = vpop.permute.xlu0 %1645
        %v1649 = vadd.f32 %v1641, %v1644
        %v1650 = vadd.f32 %v1642, %v1646
        %1651 = vrot.lane.b32.xlu0 %v1631, 125
        %v1652 = vpop.permute.xlu0 %1651
        %1653 = vrot.lane.b32.xlu0 %v1632, 125
        %v1654 = vpop.permute.xlu0 %1653
        %v1657 = vadd.f32 %v1649, %v1652
        %v1658 = vadd.f32 %v1650, %v1654
        %1659 = vrot.lane.b32.xlu0 %v1631, 124
        %v1660 = vpop.permute.xlu0 %1659
        %1661 = vrot.lane.b32.xlu0 %v1632, 124
        %v1662 = vpop.permute.xlu0 %1661
        %v1665 = vadd.f32 %v1657, %v1660
        %v1666 = vadd.f32 %v1658, %v1662
        %v1667 = vmul.f32 %v1339, %v1327
        %v1668 = vmul.f32 %v1340, %v1325
        %v1669 = vmul.f32 %v1341, %v1329
        %v1672 = vrot.slane %v1667, 1
        %v1673 = vrot.slane %v1668, 1
        %v1674 = vsel %vm583, %v1672, %v1673
        %v1677 = vadd.f32 %v1667, %v1674
        %v1678 = vadd.f32 %v1668, %v1673
        %v1679 = vrot.slane %v1668, 2
        %v1681 = vadd.f32 %v1677, %v1679
        %v1682 = vadd.f32 %v1678, %v1679
        %v1684 = vrot.slane %v1668, 3
        %v1685 = vrot.slane %v1669, 3
        %v1686 = vsel %vm596, %v1684, %v1685
        %v1689 = vadd.f32 %v1681, %v1684
        %v1690 = vadd.f32 %v1682, %v1686
        %v1691 = vrot.slane %v1668, 4
        %v1692 = vrot.slane %v1669, 4
        %v1693 = vsel %vm604, %v1691, %v1692
        %v1696 = vadd.f32 %v1689, %v1691
        %v1697 = vadd.f32 %v1690, %v1693
        %1700 = vrot.lane.b32.xlu0 %v1696, 127
        %v1701 = vpop.permute.xlu0 %1700
        %1702 = vrot.lane.b32.xlu0 %v1697, 127
        %v1703 = vpop.permute.xlu0 %1702
        %v1706 = vadd.f32 %v1696, %v1701
        %v1707 = vadd.f32 %v1697, %v1703
        %1708 = vrot.lane.b32.xlu0 %v1696, 126
        %v1709 = vpop.permute.xlu0 %1708
        %1710 = vrot.lane.b32.xlu0 %v1697, 126
        %v1711 = vpop.permute.xlu0 %1710
        %v1714 = vadd.f32 %v1706, %v1709
        %v1715 = vadd.f32 %v1707, %v1711
        %1716 = vrot.lane.b32.xlu0 %v1696, 125
        %v1717 = vpop.permute.xlu0 %1716
        %1718 = vrot.lane.b32.xlu0 %v1697, 125
        %v1719 = vpop.permute.xlu0 %1718
        %v1722 = vadd.f32 %v1714, %v1717
        %v1723 = vadd.f32 %v1715, %v1719
        %1724 = vrot.lane.b32.xlu0 %v1696, 124
        %v1725 = vpop.permute.xlu0 %1724
        %1726 = vrot.lane.b32.xlu0 %v1697, 124
        %v1727 = vpop.permute.xlu0 %1726
        %v1730 = vadd.f32 %v1722, %v1725
        %v1731 = vadd.f32 %v1723, %v1727
        %v1734 = vrot.slane %v1333, 1
        %v1735 = vrot.slane %v1334, 1
        %v1736 = vsel %vm583, %v1734, %v1735
        %v1739 = vadd.f32 %v1333, %v1736
        %v1740 = vadd.f32 %v1334, %v1735
        %v1741 = vrot.slane %v1334, 2
        %v1743 = vadd.f32 %v1739, %v1741
        %v1744 = vadd.f32 %v1740, %v1741
        %v1746 = vrot.slane %v1334, 3
        %v1747 = vrot.slane %v1335, 3
        %v1748 = vsel %vm596, %v1746, %v1747
        %v1751 = vadd.f32 %v1743, %v1746
        %v1752 = vadd.f32 %v1744, %v1748
        %v1753 = vrot.slane %v1334, 4
        %v1754 = vrot.slane %v1335, 4
        %v1755 = vsel %vm604, %v1753, %v1754
        %v1758 = vadd.f32 %v1751, %v1753
        %v1759 = vadd.f32 %v1752, %v1755
        %1762 = vrot.lane.b32.xlu0 %v1758, 127
        %v1763 = vpop.permute.xlu0 %1762
        %1764 = vrot.lane.b32.xlu0 %v1759, 127
        %v1765 = vpop.permute.xlu0 %1764
        %v1768 = vadd.f32 %v1758, %v1763
        %v1769 = vadd.f32 %v1759, %v1765
        %1770 = vrot.lane.b32.xlu0 %v1758, 126
        %v1771 = vpop.permute.xlu0 %1770
        %1772 = vrot.lane.b32.xlu0 %v1759, 126
        %v1773 = vpop.permute.xlu0 %1772
        %v1776 = vadd.f32 %v1768, %v1771
        %v1777 = vadd.f32 %v1769, %v1773
        %1778 = vrot.lane.b32.xlu0 %v1758, 125
        %v1779 = vpop.permute.xlu0 %1778
        %1780 = vrot.lane.b32.xlu0 %v1759, 125
        %v1781 = vpop.permute.xlu0 %1780
        %v1784 = vadd.f32 %v1776, %v1779
        %v1785 = vadd.f32 %v1777, %v1781
        %1786 = vrot.lane.b32.xlu0 %v1758, 124
        %v1787 = vpop.permute.xlu0 %1786
        %1788 = vrot.lane.b32.xlu0 %v1759, 124
        %v1789 = vpop.permute.xlu0 %1788
        %v1792 = vadd.f32 %v1784, %v1787
        %v1793 = vadd.f32 %v1785, %v1789
        %v1796 = vrot.slane %v1339, 1
        %v1797 = vrot.slane %v1340, 1
        %v1798 = vsel %vm583, %v1796, %v1797
        %v1801 = vadd.f32 %v1339, %v1798
        %v1802 = vadd.f32 %v1340, %v1797
        %v1803 = vrot.slane %v1340, 2
        %v1805 = vadd.f32 %v1801, %v1803
        %v1806 = vadd.f32 %v1802, %v1803
        %v1808 = vrot.slane %v1340, 3
        %v1809 = vrot.slane %v1341, 3
        %v1810 = vsel %vm596, %v1808, %v1809
        %v1813 = vadd.f32 %v1805, %v1808
        %v1814 = vadd.f32 %v1806, %v1810
        %v1815 = vrot.slane %v1340, 4
        %v1816 = vrot.slane %v1341, 4
        %v1817 = vsel %vm604, %v1815, %v1816
        %v1820 = vadd.f32 %v1813, %v1815
        %v1821 = vadd.f32 %v1814, %v1817
        %1824 = vrot.lane.b32.xlu0 %v1820, 127
        %v1825 = vpop.permute.xlu0 %1824
        %1826 = vrot.lane.b32.xlu0 %v1821, 127
        %v1827 = vpop.permute.xlu0 %1826
        %v1830 = vadd.f32 %v1820, %v1825
        %v1831 = vadd.f32 %v1821, %v1827
        %1832 = vrot.lane.b32.xlu0 %v1820, 126
        %v1833 = vpop.permute.xlu0 %1832
        %1834 = vrot.lane.b32.xlu0 %v1821, 126
        %v1835 = vpop.permute.xlu0 %1834
        %v1838 = vadd.f32 %v1830, %v1833
        %v1839 = vadd.f32 %v1831, %v1835
        %1840 = vrot.lane.b32.xlu0 %v1820, 125
        %v1841 = vpop.permute.xlu0 %1840
        %1842 = vrot.lane.b32.xlu0 %v1821, 125
        %v1843 = vpop.permute.xlu0 %1842
        %v1846 = vadd.f32 %v1838, %v1841
        %v1847 = vadd.f32 %v1839, %v1843
        %1848 = vrot.lane.b32.xlu0 %v1820, 124
        %v1849 = vpop.permute.xlu0 %1848
        %1850 = vrot.lane.b32.xlu0 %v1821, 124
        %v1851 = vpop.permute.xlu0 %1850
        %v1854 = vadd.f32 %v1846, %v1849
        %v1855 = vadd.f32 %v1847, %v1851
        %v1858 = vrot.slane %v1327, 1
        %v1859 = vrot.slane %v1325, 1
        %v1860 = vsel %vm583, %v1858, %v1859
        %v1863 = vadd.f32 %v1327, %v1860
        %v1864 = vadd.f32 %v1325, %v1859
        %v1865 = vrot.slane %v1325, 2
        %v1867 = vadd.f32 %v1863, %v1865
        %v1868 = vadd.f32 %v1864, %v1865
        %v1870 = vrot.slane %v1325, 3
        %v1871 = vrot.slane %v1329, 3
        %v1872 = vsel %vm596, %v1870, %v1871
        %v1875 = vadd.f32 %v1867, %v1870
        %v1876 = vadd.f32 %v1868, %v1872
        %v1877 = vrot.slane %v1325, 4
        %v1878 = vrot.slane %v1329, 4
        %v1879 = vsel %vm604, %v1877, %v1878
        %v1882 = vadd.f32 %v1875, %v1877
        %v1883 = vadd.f32 %v1876, %v1879
        %1886 = vrot.lane.b32.xlu0 %v1882, 127
        %v1887 = vpop.permute.xlu0 %1886
        %1888 = vrot.lane.b32.xlu0 %v1883, 127
        %v1889 = vpop.permute.xlu0 %1888
        %v1892 = vadd.f32 %v1882, %v1887
        %v1893 = vadd.f32 %v1883, %v1889
        %1894 = vrot.lane.b32.xlu0 %v1882, 126
        %v1895 = vpop.permute.xlu0 %1894
        %1896 = vrot.lane.b32.xlu0 %v1883, 126
        %v1897 = vpop.permute.xlu0 %1896
        %v1900 = vadd.f32 %v1892, %v1895
        %v1901 = vadd.f32 %v1893, %v1897
        %1902 = vrot.lane.b32.xlu0 %v1882, 125
        %v1903 = vpop.permute.xlu0 %1902
        %1904 = vrot.lane.b32.xlu0 %v1883, 125
        %v1905 = vpop.permute.xlu0 %1904
        %v1908 = vadd.f32 %v1900, %v1903
        %v1909 = vadd.f32 %v1901, %v1905
        %1910 = vrot.lane.b32.xlu0 %v1882, 124
        %v1911 = vpop.permute.xlu0 %1910
        %1912 = vrot.lane.b32.xlu0 %v1883, 124
        %v1913 = vpop.permute.xlu0 %1912
        %v1916 = vadd.f32 %v1908, %v1911
        %v1917 = vadd.f32 %v1909, %v1913
        %v1918 = vadd.f32 %v1405, 1e-06
        %v1919 = vadd.f32 %v1406, 1e-06
        %v1920 = vadd.f32 %v1470, 1e-06
        %v1921 = vadd.f32 %v1471, 1e-06
        %v1922 = vadd.f32 %v1535, 1e-06
        %v1923 = vadd.f32 %v1536, 1e-06
        %v1924 = vmul.f32 %v1920, %v1922
        %v1925 = vmul.f32 %v1921, %v1923
        %v1926 = vmul.f32 %v1730, %v1730
        %v1927 = vmul.f32 %v1731, %v1731
        %v1928 = vsub.f32 %v1924, %v1926
        %v1929 = vsub.f32 %v1925, %v1927
        %v1930 = vmul.f32 %v1665, %v1730
        %v1931 = vmul.f32 %v1666, %v1731
        %v1932 = vmul.f32 %v1600, %v1922
        %v1933 = vmul.f32 %v1601, %v1923
        %v1934 = vsub.f32 %v1930, %v1932
        %v1935 = vsub.f32 %v1931, %v1933
        %v1936 = vmul.f32 %v1600, %v1730
        %v1937 = vmul.f32 %v1601, %v1731
        %v1938 = vmul.f32 %v1665, %v1920
        %v1939 = vmul.f32 %v1666, %v1921
        %v1940 = vsub.f32 %v1936, %v1938
        %v1941 = vsub.f32 %v1937, %v1939
        %v1942 = vmul.f32 %v1918, %v1922
        %v1943 = vmul.f32 %v1919, %v1923
        %v1944 = vmul.f32 %v1665, %v1665
        %v1945 = vmul.f32 %v1666, %v1666
        %v1946 = vsub.f32 %v1942, %v1944
        %v1947 = vsub.f32 %v1943, %v1945
        %v1948 = vmul.f32 %v1600, %v1665
        %v1949 = vmul.f32 %v1601, %v1666
        %v1950 = vmul.f32 %v1918, %v1730
        %v1951 = vmul.f32 %v1919, %v1731
        %v1952 = vsub.f32 %v1948, %v1950
        %v1953 = vsub.f32 %v1949, %v1951
        %v1954 = vmul.f32 %v1918, %v1920
        %v1955 = vmul.f32 %v1919, %v1921
        %v1956 = vmul.f32 %v1600, %v1600
        %v1957 = vmul.f32 %v1601, %v1601
        %v1958 = vsub.f32 %v1954, %v1956
        %v1959 = vsub.f32 %v1955, %v1957
        %v1960 = vmul.f32 %v1918, %v1928
        %v1961 = vmul.f32 %v1919, %v1929
        %v1962 = vmul.f32 %v1600, %v1934
        %v1963 = vmul.f32 %v1601, %v1935
        %v1964 = vadd.f32 %v1960, %v1962
        %v1965 = vadd.f32 %v1961, %v1963
        %v1966 = vmul.f32 %v1665, %v1940
        %v1967 = vmul.f32 %v1666, %v1941
        %v1968 = vadd.f32 %v1964, %v1966
        %v1969 = vadd.f32 %v1965, %v1967
        %v1970 = vrcp.pop %v1968
        %v1971 = vmul.f32 1.0, %v1970
        %v1972 = vrcp.pop %v1969
        %v1973 = vmul.f32 1.0, %v1972
        %v1974 = vmul.f32 %v1928, %v1792
        %v1975 = vmul.f32 %v1929, %v1793
        %v1976 = vmul.f32 %v1934, %v1854
        %v1977 = vmul.f32 %v1935, %v1855
        %v1978 = vadd.f32 %v1974, %v1976
        %v1979 = vadd.f32 %v1975, %v1977
        %v1980 = vmul.f32 %v1940, %v1916
        %v1981 = vmul.f32 %v1941, %v1917
        %v1982 = vadd.f32 %v1978, %v1980
        %v1983 = vadd.f32 %v1979, %v1981
        %v1984 = vmul.f32 %v1982, %v1971
        %v1985 = vmul.f32 %v1983, %v1973
        %v1986 = vmul.f32 %v1934, %v1792
        %v1987 = vmul.f32 %v1935, %v1793
        %v1988 = vmul.f32 %v1946, %v1854
        %v1989 = vmul.f32 %v1947, %v1855
        %v1990 = vadd.f32 %v1986, %v1988
        %v1991 = vadd.f32 %v1987, %v1989
        %v1992 = vmul.f32 %v1952, %v1916
        %v1993 = vmul.f32 %v1953, %v1917
        %v1994 = vadd.f32 %v1990, %v1992
        %v1995 = vadd.f32 %v1991, %v1993
        %v1996 = vmul.f32 %v1994, %v1971
        %v1997 = vmul.f32 %v1995, %v1973
        %v1998 = vmul.f32 %v1940, %v1792
        %v1999 = vmul.f32 %v1941, %v1793
        %v2000 = vmul.f32 %v1952, %v1854
        %v2001 = vmul.f32 %v1953, %v1855
        %v2002 = vadd.f32 %v1998, %v2000
        %v2003 = vadd.f32 %v1999, %v2001
        %v2004 = vmul.f32 %v1958, %v1916
        %v2005 = vmul.f32 %v1959, %v1917
        %v2006 = vadd.f32 %v2002, %v2004
        %v2007 = vadd.f32 %v2003, %v2005
        %v2008 = vmul.f32 %v2006, %v1971
        %v2009 = vmul.f32 %v2007, %v1973
        %v2010 = vmul.f32 %v1984, %v1984
        %v2011 = vmul.f32 %v1985, %v1985
        %v2012 = vmul.f32 %v1996, %v1996
        %v2013 = vmul.f32 %v1997, %v1997
        %v2014 = vadd.f32 %v2010, %v2012
        %v2015 = vadd.f32 %v2011, %v2013
        %v2016 = vmul.f32 %v2008, %v2008
        %v2017 = vmul.f32 %v2009, %v2009
        %v2018 = vadd.f32 %v2014, %v2016
        %v2019 = vadd.f32 %v2015, %v2017
        %v2020 = vrsqrt.pop %v2018
        %v2021 = vrsqrt.pop %v2019
        %v2022 = vmul.f32 %v1984, %v2020
        %v2023 = vmul.f32 %v1985, %v2021
        %v2024 = vmul.f32 %v1996, %v2020
        %v2025 = vmul.f32 %v1997, %v2021
        %v2026 = vmul.f32 %v2008, %v2020
        %v2027 = vmul.f32 %v2009, %v2021
        %2028 = vrot.lane.b32.xlu0 %v1741, 126
        %v2029 = vpop.permute.xlu0 %2028
        %v2031 = vmul.f32 %v2022, %v2029
        %v2032 = vmul.f32 %v2023, %v2029
        %2033 = vrot.lane.b32.xlu0 %v1803, 126
        %v2034 = vpop.permute.xlu0 %2033
        %v2036 = vmul.f32 %v2024, %v2034
        %v2037 = vmul.f32 %v2025, %v2034
        %v2038 = vadd.f32 %v2031, %v2036
        %v2039 = vadd.f32 %v2032, %v2037
        %2040 = vrot.lane.b32.xlu0 %v1865, 126
        %v2041 = vpop.permute.xlu0 %2040
        %v2043 = vmul.f32 %v2026, %v2041
        %v2044 = vmul.f32 %v2027, %v2041
        %v2045 = vadd.f32 %v2038, %v2043
        %v2046 = vadd.f32 %v2039, %v2044
        %vm2047 = vcmp.gt.f32.partialorder %v2045, 0.0
        %vm2048 = vcmp.gt.f32.partialorder %v2046, 0.0
        %v2049 = vsel %vm2047, -1.0, 1.0
        %v2050 = vsel %vm2048, -1.0, 1.0
        %v2051 = vmul.f32 %v2022, %v2049
        %v2052 = vmul.f32 %v2023, %v2050
        %v2053 = vmul.f32 %v2024, %v2049
        %v2054 = vmul.f32 %v2025, %v2050
        %v2055 = vmul.f32 %v2026, %v2049
        %v2056 = vmul.f32 %v2027, %v2050
        %vm2057 = vcmp.gt.f32.partialorder %v1325, 0.0
        %v2060 = vrot.slane %v2051, 6
        %v2061 = vrot.slane %v2052, 6
        %v2062 = vsel %vm1299, %v2060, %v2061
        %2063 = vrot.lane.b32.xlu0 %v2062, 2
        %v2064 = vpop.permute.xlu0 %2063
        %v2066 = vsel %vm2057, %v2064, 0.0
        %v2069 = vrot.slane %v2053, 6
        %v2070 = vrot.slane %v2054, 6
        %v2071 = vsel %vm1299, %v2069, %v2070
        %2072 = vrot.lane.b32.xlu0 %v2071, 2
        %v2073 = vpop.permute.xlu0 %2072
        %v2075 = vsel %vm2057, %v2073, 0.0
        %v2078 = vrot.slane %v2055, 6
        %v2079 = vrot.slane %v2056, 6
        %v2080 = vsel %vm1299, %v2078, %v2079
        %2081 = vrot.lane.b32.xlu0 %v2080, 2
        %v2082 = vpop.permute.xlu0 %2081
        %v2084 = vsel %vm2057, %v2082, 0.0
        %v2085 = vsub.f32 %v2066, %v1306
        %v2086 = vand.u32 2147483647, %v2085
        %v2087 = vsub.f32 %v2075, %v1315
        %v2088 = vand.u32 2147483647, %v2087
        %v2089 = vadd.f32 %v2086, %v2088
        %v2090 = vsub.f32 %v2084, %v1324
        %v2091 = vand.u32 2147483647, %v2090
        %v2092 = vadd.f32 %v2089, %v2091
        %2094 = vrot.lane.b32.xlu0 %v2092, 126
        %v2095 = vpop.permute.xlu0 %2094
        %vm2097 = vcmask 130048
        %v2098 = vsel %vm2097, %v2095, 0.0
        %2099 = vadd.xlane.f32.xlu0 %v2098
        %v2100 = vpop.xlane.xlu0 %2099
        %v2101 = vrot.slane %v2100, 4
        %v2102 = vadd.f32 %v2100, %v2101
        %v2103 = vrot.slane %v2102, 2
        %v2104 = vadd.f32 %v2102, %v2103
        %v2105 = vrot.slane %v2104, 1
        %v2106 = vadd.f32 %v2104, %v2105
        %s2107 = vtos %v2106
        %v2108 = vstv %s2107
        %2109 = vst [vmem:[%s519] sm:$0xff] %v2108
        %s2110 = sand.u32 %s246, 1
        %s2111 = scalar_lea.sflag [#allocation4], %s2110
        %s2112 = sand.u32 %s246, 1
        %s2113 = smul.addr %s2112, 8
        %s2114 = scalar_lea.vmem [#allocation13], %s2113
        // Predicated region
        $region69: #{tpu_custom_call.1} parent=43 // pred_check
          %p2115 = pneg %p256
        $region70: #{tpu_custom_call.1} parent=43 // pred_check_branch
          %2117 = sbr.rel (%p2115) target = $region72
        $region71: #{tpu_custom_call.1} parent=43 // pred_region
          %s2119 = ssub.s32 128, 128
          %2120 = vsyncadd %s2111, %s2119
          %s2121 = smul.addr %s36, 2
          %s2122 = sadd.s32 %s37, %s2121
          %s2123 = smul.addr %s2122, 128
          %s2124 = scalar_lea.hbm %s6, %s2123
          %s2126 = sshll.u32 %s2114, 4
          %s2127 = int_to_ptr.vmem [resolvable:$true] %s2126
          %2129 = dma.vmem_to_hbm [thread:$0]  %s2127, 128, %s2124, %s2111
        $region72: #{tpu_custom_call.1} parent=43 // pred_fallthru
          _
      $region44: #{tpu_custom_call.1} parent=5 // pred_fallthru
        _
      %p2130 = scmp.le.s32.totalorder 2, %s27
      // Predicated region
      $region73: #{tpu_custom_call.1} parent=5 // pred_check
        %p2131 = pneg %p2130
      $region74: #{tpu_custom_call.1} parent=5 // pred_check_branch
        %2133 = sbr.rel (%p2131) target = $region76
      $region75: #{tpu_custom_call.1} parent=5 // pred_region
        %s2134 = ssub.s32 %s27, 2
        // Predicated region
        $region77: #{tpu_custom_call.1} parent=75 // pred_check
          %p2135 = pneg %p262
        $region78: #{tpu_custom_call.1} parent=75 // pred_check_branch
          %2137 = sbr.rel (%p2135) target = $region80
        $region79: #{tpu_custom_call.1} parent=75 // pred_region
          %s2138 = sand.u32 %s247, 1
          %s2139 = scalar_lea.sflag [#allocation4], %s2138
          %s2140 = sand.u32 %s247, 1
          %s2141 = smul.addr %s2140, 8
          %s2142 = scalar_lea.vmem [#allocation13], %s2141
          %2143 = dma.done %s2139, 128
        $region80: #{tpu_custom_call.1} parent=75 // pred_fallthru
          _
      $region76: #{tpu_custom_call.1} parent=5 // pred_fallthru
        _
    $region6: #{tpu_custom_call.1} parent=1 // loop_footer
      %s31 = sadd.s32 1, %s27
    $region7: #{tpu_custom_call.1} parent=1 // loop_footer_branch
      %26 = sbr.rel target = $region3
    $region8: #{tpu_custom_call.1} parent=1 // loop_exit
      _
    %2144 = vsyncpa [#allocation3], 1
    %s2145 = scalar_lea.sflag [#allocation3], 1
    %2146 = vsyncpa %s2145, 1
    %2147 = vsyncpa [#allocation6], 1
    %s2148 = scalar_lea.sflag [#allocation6], 1
    %2149 = vsyncpa %s2148, 1
    %2150 = vsyncpa [#allocation9], 1
    %s2151 = scalar_lea.sflag [#allocation9], 1
    %2152 = vsyncpa %s2151, 1
    %2153 = vsyncpa [#allocation12], 1
    %s2154 = scalar_lea.sflag [#allocation12], 1
    %2155 = vsyncpa %s2154, 1
    %2156 = vsyncpa [#allocation4], 1
    %s2157 = scalar_lea.sflag [#allocation4], 1
    %2158 = vsyncpa %s2157, 1

</llo_original>
